<compile_context>
chip_gen: v5e
topology: v5e:2x2
jax: 0.10.0
libtpu: 0.0.40
codegen_flags: <defaults>
</compile_context>

<pallas_src>
import functools

import jax
import jax.numpy as jnp
from jax.experimental import pallas as pl
from jax.experimental.pallas import tpu as pltpu

LANE = 128
SUBLANE = 8
# Cap so the per-step live set (dominated by the tb x 512 f32 intermediate)
# stays well inside v7x's ~32 MiB scoped-VMEM default.
MAX_BATCH_TILE = 4096


def _round_up(n, m):
    return ((n + m - 1) // m) * m


def _actor_kernel(x_ref,
                  w1_ref, w2_ref, w3_ref, w4_ref, w5_ref,
                  b_ref, scaler_ref,
                  o_ref,
                  *, bias_offsets, bias_widths):
    """One batch tile of the Actor MLP (5 fused layers, bf16 MXU / f32 accum)."""

    def mm(h, w_ref):
        # bf16 x bf16 on the MXU with f32 accumulation.
        return jnp.dot(h, w_ref[...], preferred_element_type=jnp.float32)

    def bias(i):
        off = bias_offsets[i]
        return b_ref[:, off:off + bias_widths[i]]      # static, 128-aligned slice

    scale = scaler_ref[0]                              # read the SMEM scalar once

    # Activations are cast to bf16 immediately (halves vreg/VMEM pressure);
    # the very next consumer is a bf16 MXU dot, so numerics are unchanged.
    h = jnp.tanh(mm(x_ref[...], w1_ref) + bias(0)).astype(jnp.bfloat16)
    h = jnp.maximum(mm(h, w2_ref) + bias(1), 0.0).astype(jnp.bfloat16)
    h = jnp.maximum(mm(h, w3_ref) + bias(2), 0.0).astype(jnp.bfloat16)
    h = jnp.maximum(mm(h, w4_ref) + bias(3), 0.0).astype(jnp.bfloat16)
    h = jnp.tanh(mm(h, w5_ref) + bias(4))
    o_ref[...] = h * scale


def _pick_batch_tile(B, block_b):
    bp8 = _round_up(max(B, SUBLANE), SUBLANE)
    if block_b is not None:
        tb = min(_round_up(block_b, SUBLANE), bp8)
    elif bp8 <= 1024:
        # Overhead/latency-bound regime: one grid step, no per-step overhead.
        tb = bp8
    else:
        # Large batch: ~2 tiles so dual-TC chips (v7x) split the work via the
        # "parallel" grid axis; capped for v7x's smaller scoped VMEM.
        tb = min(_round_up(pl.cdiv(bp8, 2), SUBLANE), MAX_BATCH_TILE)
    bp = _round_up(bp8, tb)
    return tb, bp


def actor_forward(x, params, scaler, *, block_b=None):
    """Actor forward.

    x:       (B, input_size) array (any float dtype; normalized to f32 then bf16)
    params:  list of 5 (W, b); W is (in, out) f32 (i.e. PyTorch weight.T), b is (out,)
    scaler:  (1,) f32 action scale.
    block_b: optional batch-tile override (rows per grid step).
    """
    x = jnp.asarray(x, jnp.float32)
    B, d_in = x.shape
    dims = [w.shape[0] for (w, _) in params] + [params[-1][0].shape[1]]
    assert dims[0] == d_in, (dims, d_in)
    pdims = [_round_up(d, LANE) for d in dims]          # every width -> lane multiple
    out_dim, out_pad = dims[-1], pdims[-1]

    # --- bf16 weights, zero-padded to lane-multiple (in, out) on every layer ---
    # --- plus all biases fused into one lane-aligned f32 row (single DMA)    ---
    ws, b_rows, offsets, widths = [], [], [], []
    off = 0
    for li, (w, b) in enumerate(params):
        ip, op = pdims[li], pdims[li + 1]
        wb = jnp.pad(w.astype(jnp.bfloat16),
                     ((0, ip - w.shape[0]), (0, op - w.shape[1])))
        ws.append(wb)
        b_rows.append(jnp.pad(jnp.reshape(b.astype(jnp.float32), (1, -1)),
                              ((0, 0), (0, op - b.shape[0]))))
        offsets.append(off)
        widths.append(op)
        off += op
    b_all = jnp.concatenate(b_rows, axis=1)             # (1, sum(padded widths))

    # --- batch tiling (few, large steps) ---
    tb, bp = _pick_batch_tile(B, block_b)
    grid = (bp // tb,)

    # x: bf16 (halves DMA bytes), pad batch rows and input lanes with zeros.
    x_p = jnp.pad(x.astype(jnp.bfloat16), ((0, bp - B), (0, pdims[0] - d_in)))

    kernel = functools.partial(_actor_kernel,
                               bias_offsets=tuple(offsets),
                               bias_widths=tuple(widths))

    flops = 2 * B * sum(dims[i] * dims[i + 1] for i in range(len(dims) - 1))
    cost = pl.CostEstimate(
        flops=flops,
        transcendentals=B * (dims[1] + dims[-1]),        # two tanh layers
        bytes_accessed=int(x_p.size * 2 + sum(w.size * 2 for w in ws)
                           + b_all.size * 4 + bp * out_pad * 4 + scaler.size * 4),
    )

    def call(resident_kwargs):
        const = lambda i: (0, 0)
        in_specs = [pl.BlockSpec((tb, pdims[0]), lambda i: (i, 0))]       # x: tiled
        in_specs += [pl.BlockSpec(w.shape, const, **resident_kwargs) for w in ws]
        in_specs += [pl.BlockSpec(b_all.shape, const, **resident_kwargs)]  # fused biases
        in_specs += [pl.BlockSpec(memory_space=pltpu.MemorySpace.SMEM)]    # scaler scalar
        return pl.pallas_call(
            kernel,
            out_shape=jax.ShapeDtypeStruct((bp, out_pad), jnp.float32),
            grid_spec=pltpu.PrefetchScalarGridSpec(
                num_scalar_prefetch=0,
                grid=grid,
                in_specs=in_specs,
                out_specs=pl.BlockSpec((tb, out_pad), lambda i: (i, 0)),
            ),
            compiler_params=pltpu.CompilerParams(
                dimension_semantics=("parallel",)),
            cost_estimate=cost,
        )(x_p, *ws, b_all, scaler)

    try:
        # Weights/biases use constant index_maps and are never re-fetched:
        # single-buffering frees ~300 KiB of pointless double-buffer VMEM.
        out = call(dict(pipeline_mode=pl.Buffered(1)))
    except Exception:
        # Fallback if this Pallas build rejects single-buffered resident operands.
        out = call({})

    return out[:B, :out_dim]


def xavier_uniform(key, fan_in, fan_out):
    # torch.nn.init.xavier_uniform_ bound = sqrt(6 / (fan_in + fan_out)).
    bound = (6.0 / (fan_in + fan_out)) ** 0.5
    return jax.random.uniform(key, (fan_in, fan_out), jnp.float32, -bound, bound)


def make_actor_params(key, input_size, output_size):
    dims = [input_size, 128, 512, 128, 64, output_size]
    params = []
    keys = jax.random.split(key, len(dims) - 1)
    for k, d_i, d_o in zip(keys, dims[:-1], dims[1:]):
        w = xavier_uniform(k, d_i, d_o)            # stored as (in, out) == torch W.T
        b = jnp.zeros((d_o,), jnp.float32)         # nn.init.zeros_
        params.append((w, b))
    return params


def actor_reference(x, params, scaler):
    """Pure-JAX reference matching the kernel's bf16-matmul / f32-accumulate numerics."""
    def lin(h, w, b):
        return jnp.dot(h.astype(jnp.bfloat16), w.astype(jnp.bfloat16),
                       preferred_element_type=jnp.float32) + jnp.reshape(b, (1, -1))
    h = jnp.tanh(lin(x, *params[0]))
    h = jnp.maximum(lin(h, *params[1]), 0.0)
    h = jnp.maximum(lin(h, *params[2]), 0.0)
    h = jnp.maximum(lin(h, *params[3]), 0.0)
    h = jnp.tanh(lin(h, *params[4]))
    return h * scaler[0]


if __name__ == "__main__":
    key = jax.random.PRNGKey(0)
    k_params, k_x = jax.random.split(key)

    batch = 64
    input_size = 32
    output_size = 8
    activation = 2.0     # action scale

    params = make_actor_params(k_params, input_size, output_size)
    scaler = jnp.array([activation], dtype=jnp.float32)
    x = jax.random.normal(k_x, (batch, input_size), dtype=jnp.float32)

    ref = actor_reference(x, params, scaler)

    # Default tiling: whole batch in a single grid step (overhead-bound regime).
    out = jax.block_until_ready(actor_forward(x, params, scaler))
    assert out.shape == (batch, output_size), out.shape
    err = float(jnp.max(jnp.abs(out - ref)))
    assert jnp.allclose(out, ref, atol=2e-2, rtol=2e-2), f"mismatch (grid=1): {err}"

    # Also exercise the multi-step batch grid path (grid=2).
    out2 = jax.block_until_ready(actor_forward(x, params, scaler, block_b=32))
    err2 = float(jnp.max(jnp.abs(out2 - ref)))
    assert jnp.allclose(out2, ref, atol=2e-2, rtol=2e-2), f"mismatch (grid=2): {err2}"

    print("KERNEL_OK")
</pallas_src>

<mosaic_0001>
module attributes {stable_mosaic.version = 11 : i64} {
  func.func @_actor_kernel(%arg0: i32, %arg1: memref<64x128xbf16, #tpu.memory_space<vmem>>, %arg2: memref<128x128xbf16, #tpu.memory_space<vmem>>, %arg3: memref<128x512xbf16, #tpu.memory_space<vmem>>, %arg4: memref<512x128xbf16, #tpu.memory_space<vmem>>, %arg5: memref<128x128xbf16, #tpu.memory_space<vmem>>, %arg6: memref<128x128xbf16, #tpu.memory_space<vmem>>, %arg7: memref<1x1024xf32, #tpu.memory_space<vmem>>, %arg8: memref<1xf32, #tpu.memory_space<smem>>, %arg9: memref<64x128xf32, #tpu.memory_space<vmem>>) attributes {dimension_semantics = [#tpu.dimension_semantics<parallel>], iteration_bounds = array<i64: 1>, scalar_prefetch = 0 : i64, scratch_operands = 0 : i64, tpu.core_type = #tpu.core_type<tc>, window_params = [{transform_indices = @transform_0, window_bounds = array<i64: 64, 128>}, {pipeline_mode = #tpu.pipeline_mode<synchronous>, transform_indices = @transform_1, window_bounds = array<i64: 128, 128>}, {pipeline_mode = #tpu.pipeline_mode<synchronous>, transform_indices = @transform_2, window_bounds = array<i64: 128, 512>}, {pipeline_mode = #tpu.pipeline_mode<synchronous>, transform_indices = @transform_3, window_bounds = array<i64: 512, 128>}, {pipeline_mode = #tpu.pipeline_mode<synchronous>, transform_indices = @transform_4, window_bounds = array<i64: 128, 128>}, {pipeline_mode = #tpu.pipeline_mode<synchronous>, transform_indices = @transform_5, window_bounds = array<i64: 128, 128>}, {pipeline_mode = #tpu.pipeline_mode<synchronous>, transform_indices = @transform_6, window_bounds = array<i64: 1, 1024>}, {transform_indices = @transform_7, window_bounds = array<i64: 1>}, {transform_indices = @transform_8, window_bounds = array<i64: 64, 128>}]} {
    %c0 = arith.constant 0 : index
    %0 = memref.load %arg8[%c0] : memref<1xf32, #tpu.memory_space<smem>>
    %c0_0 = arith.constant 0 : index
    %c0_1 = arith.constant 0 : index
    %1 = vector.load %arg1[%c0_0, %c0_1] : memref<64x128xbf16, #tpu.memory_space<vmem>>, vector<64x128xbf16>
    %c0_2 = arith.constant 0 : index
    %c0_3 = arith.constant 0 : index
    %2 = vector.load %arg2[%c0_2, %c0_3] : memref<128x128xbf16, #tpu.memory_space<vmem>>, vector<128x128xbf16>
    %cst = arith.constant dense<0.000000e+00> : vector<64x128xf32>
    %3 = tpu.matmul %1, %2, %cst {dimension_numbers = #tpu.dot_dimension_numbers<[1], [0], [0], [1], [0, 0, 1, 1], [], []>} : vector<64x128xbf16>, vector<128x128xbf16>, vector<64x128xf32> -> vector<64x128xf32>
    %c0_4 = arith.constant 0 : index
    %c0_5 = arith.constant 0 : index
    %4 = vector.load %arg7[%c0_4, %c0_5] : memref<1x1024xf32, #tpu.memory_space<vmem>>, vector<1x128xf32>
    %5 = vector.broadcast %4 : vector<1x128xf32> to vector<64x128xf32>
    %6 = arith.addf %3, %5 : vector<64x128xf32>
    %7 = math.tanh %6 : vector<64x128xf32>
    %8 = arith.truncf %7 : vector<64x128xf32> to vector<64x128xbf16>
    %c0_6 = arith.constant 0 : index
    %c0_7 = arith.constant 0 : index
    %9 = vector.load %arg3[%c0_6, %c0_7] : memref<128x512xbf16, #tpu.memory_space<vmem>>, vector<128x512xbf16>
    %cst_8 = arith.constant dense<0.000000e+00> : vector<64x512xf32>
    %10 = tpu.matmul %8, %9, %cst_8 {dimension_numbers = #tpu.dot_dimension_numbers<[1], [0], [0], [1], [0, 0, 1, 1], [], []>} : vector<64x128xbf16>, vector<128x512xbf16>, vector<64x512xf32> -> vector<64x512xf32>
    %c0_9 = arith.constant 0 : index
    %c128 = arith.constant 128 : index
    %11 = vector.load %arg7[%c0_9, %c128] : memref<1x1024xf32, #tpu.memory_space<vmem>>, vector<1x512xf32>
    %12 = vector.broadcast %11 : vector<1x512xf32> to vector<64x512xf32>
    %13 = arith.addf %10, %12 : vector<64x512xf32>
    %cst_10 = arith.constant 0.000000e+00 : f32
    %14 = vector.broadcast %cst_10 : f32 to vector<64x512xf32>
    %15 = arith.maximumf %13, %14 : vector<64x512xf32>
    %16 = arith.truncf %15 : vector<64x512xf32> to vector<64x512xbf16>
    %c0_11 = arith.constant 0 : index
    %c0_12 = arith.constant 0 : index
    %17 = vector.load %arg4[%c0_11, %c0_12] : memref<512x128xbf16, #tpu.memory_space<vmem>>, vector<512x128xbf16>
    %cst_13 = arith.constant dense<0.000000e+00> : vector<64x128xf32>
    %18 = tpu.matmul %16, %17, %cst_13 {dimension_numbers = #tpu.dot_dimension_numbers<[1], [0], [0], [1], [0, 0, 1, 1], [], []>} : vector<64x512xbf16>, vector<512x128xbf16>, vector<64x128xf32> -> vector<64x128xf32>
    %c0_14 = arith.constant 0 : index
    %c640 = arith.constant 640 : index
    %19 = vector.load %arg7[%c0_14, %c640] : memref<1x1024xf32, #tpu.memory_space<vmem>>, vector<1x128xf32>
    %20 = vector.broadcast %19 : vector<1x128xf32> to vector<64x128xf32>
    %21 = arith.addf %18, %20 : vector<64x128xf32>
    %cst_15 = arith.constant 0.000000e+00 : f32
    %22 = vector.broadcast %cst_15 : f32 to vector<64x128xf32>
    %23 = arith.maximumf %21, %22 : vector<64x128xf32>
    %24 = arith.truncf %23 : vector<64x128xf32> to vector<64x128xbf16>
    %c0_16 = arith.constant 0 : index
    %c0_17 = arith.constant 0 : index
    %25 = vector.load %arg5[%c0_16, %c0_17] : memref<128x128xbf16, #tpu.memory_space<vmem>>, vector<128x128xbf16>
    %cst_18 = arith.constant dense<0.000000e+00> : vector<64x128xf32>
    %26 = tpu.matmul %24, %25, %cst_18 {dimension_numbers = #tpu.dot_dimension_numbers<[1], [0], [0], [1], [0, 0, 1, 1], [], []>} : vector<64x128xbf16>, vector<128x128xbf16>, vector<64x128xf32> -> vector<64x128xf32>
    %c0_19 = arith.constant 0 : index
    %c768 = arith.constant 768 : index
    %27 = vector.load %arg7[%c0_19, %c768] : memref<1x1024xf32, #tpu.memory_space<vmem>>, vector<1x128xf32>
    %28 = vector.broadcast %27 : vector<1x128xf32> to vector<64x128xf32>
    %29 = arith.addf %26, %28 : vector<64x128xf32>
    %cst_20 = arith.constant 0.000000e+00 : f32
    %30 = vector.broadcast %cst_20 : f32 to vector<64x128xf32>
    %31 = arith.maximumf %29, %30 : vector<64x128xf32>
    %32 = arith.truncf %31 : vector<64x128xf32> to vector<64x128xbf16>
    %c0_21 = arith.constant 0 : index
    %c0_22 = arith.constant 0 : index
    %33 = vector.load %arg6[%c0_21, %c0_22] : memref<128x128xbf16, #tpu.memory_space<vmem>>, vector<128x128xbf16>
    %cst_23 = arith.constant dense<0.000000e+00> : vector<64x128xf32>
    %34 = tpu.matmul %32, %33, %cst_23 {dimension_numbers = #tpu.dot_dimension_numbers<[1], [0], [0], [1], [0, 0, 1, 1], [], []>} : vector<64x128xbf16>, vector<128x128xbf16>, vector<64x128xf32> -> vector<64x128xf32>
    %c0_24 = arith.constant 0 : index
    %c896 = arith.constant 896 : index
    %35 = vector.load %arg7[%c0_24, %c896] : memref<1x1024xf32, #tpu.memory_space<vmem>>, vector<1x128xf32>
    %36 = vector.broadcast %35 : vector<1x128xf32> to vector<64x128xf32>
    %37 = arith.addf %34, %36 : vector<64x128xf32>
    %38 = math.tanh %37 : vector<64x128xf32>
    %39 = vector.broadcast %0 : f32 to vector<64x128xf32>
    %40 = arith.mulf %38, %39 : vector<64x128xf32>
    %c0_25 = arith.constant 0 : index
    %c0_26 = arith.constant 0 : index
    %41 = vector.load %arg9[%c0_25, %c0_26] : memref<64x128xf32, #tpu.memory_space<vmem>>, vector<64x128xf32>
    tpu.vector_store %arg9[%c0_25, %c0_26], %40 {strides = array<i32>} : memref<64x128xf32, #tpu.memory_space<vmem>>, vector<64x128xf32>,
    return
  }
  func.func @transform_0(%arg0: i32) -> (i32, i32) {
    %c0_i32 = arith.constant 0 : i32
    %c0_i32_0 = arith.constant 0 : i32
    return %arg0, %c0_i32 : i32, i32
  }
  func.func @transform_1(%arg0: i32) -> (i32, i32) {
    %c0_i32 = arith.constant 0 : i32
    %c0_i32_0 = arith.constant 0 : i32
    %c0_i32_1 = arith.constant 0 : i32
    return %c0_i32, %c0_i32_0 : i32, i32
  }
  func.func @transform_2(%arg0: i32) -> (i32, i32) {
    %c0_i32 = arith.constant 0 : i32
    %c0_i32_0 = arith.constant 0 : i32
    %c0_i32_1 = arith.constant 0 : i32
    return %c0_i32, %c0_i32_0 : i32, i32
  }
  func.func @transform_3(%arg0: i32) -> (i32, i32) {
    %c0_i32 = arith.constant 0 : i32
    %c0_i32_0 = arith.constant 0 : i32
    %c0_i32_1 = arith.constant 0 : i32
    return %c0_i32, %c0_i32_0 : i32, i32
  }
  func.func @transform_4(%arg0: i32) -> (i32, i32) {
    %c0_i32 = arith.constant 0 : i32
    %c0_i32_0 = arith.constant 0 : i32
    %c0_i32_1 = arith.constant 0 : i32
    return %c0_i32, %c0_i32_0 : i32, i32
  }
  func.func @transform_5(%arg0: i32) -> (i32, i32) {
    %c0_i32 = arith.constant 0 : i32
    %c0_i32_0 = arith.constant 0 : i32
    %c0_i32_1 = arith.constant 0 : i32
    return %c0_i32, %c0_i32_0 : i32, i32
  }
  func.func @transform_6(%arg0: i32) -> (i32, i32) {
    %c0_i32 = arith.constant 0 : i32
    %c0_i32_0 = arith.constant 0 : i32
    %c0_i32_1 = arith.constant 0 : i32
    return %c0_i32, %c0_i32_0 : i32, i32
  }
  func.func @transform_7(%arg0: i32) -> i32 {
    %c0_i32 = arith.constant 0 : i32
    %c0_i32_0 = arith.constant 0 : i32
    return %c0_i32 : i32
  }
  func.func @transform_8(%arg0: i32) -> (i32, i32) {
    %c0_i32 = arith.constant 0 : i32
    %c0_i32_0 = arith.constant 0 : i32
    return %arg0, %c0_i32 : i32, i32
  }
}

module attributes {stable_mosaic.version = 11 : i64} {
  func.func @_actor_kernel(%arg0: i32, %arg1: memref<64x128xbf16, #tpu.memory_space<vmem>>, %arg2: memref<128x128xbf16, #tpu.memory_space<vmem>>, %arg3: memref<128x512xbf16, #tpu.memory_space<vmem>>, %arg4: memref<512x128xbf16, #tpu.memory_space<vmem>>, %arg5: memref<128x128xbf16, #tpu.memory_space<vmem>>, %arg6: memref<128x128xbf16, #tpu.memory_space<vmem>>, %arg7: memref<1x1024xf32, #tpu.memory_space<vmem>>, %arg8: memref<1xf32, #tpu.memory_space<smem>>, %arg9: memref<64x128xf32, #tpu.memory_space<vmem>>) attributes {dimension_semantics = [#tpu.dimension_semantics<parallel>], iteration_bounds = array<i64: 1>, scalar_prefetch = 0 : i64, scratch_operands = 0 : i64, tpu.core_type = #tpu.core_type<tc>, window_params = [{transform_indices = @transform_0, window_bounds = array<i64: 64, 128>}, {pipeline_mode = #tpu.pipeline_mode<synchronous>, transform_indices = @transform_1, window_bounds = array<i64: 128, 128>}, {pipeline_mode = #tpu.pipeline_mode<synchronous>, transform_indices = @transform_2, window_bounds = array<i64: 128, 512>}, {pipeline_mode = #tpu.pipeline_mode<synchronous>, transform_indices = @transform_3, window_bounds = array<i64: 512, 128>}, {pipeline_mode = #tpu.pipeline_mode<synchronous>, transform_indices = @transform_4, window_bounds = array<i64: 128, 128>}, {pipeline_mode = #tpu.pipeline_mode<synchronous>, transform_indices = @transform_5, window_bounds = array<i64: 128, 128>}, {pipeline_mode = #tpu.pipeline_mode<synchronous>, transform_indices = @transform_6, window_bounds = array<i64: 1, 1024>}, {transform_indices = @transform_7, window_bounds = array<i64: 1>}, {transform_indices = @transform_8, window_bounds = array<i64: 64, 128>}]} {
    %c0 = arith.constant 0 : index
    %0 = memref.load %arg8[%c0] : memref<1xf32, #tpu.memory_space<smem>>
    %c0_0 = arith.constant 0 : index
    %c0_1 = arith.constant 0 : index
    %1 = vector.load %arg1[%c0_0, %c0_1] : memref<64x128xbf16, #tpu.memory_space<vmem>>, vector<64x128xbf16>
    %c0_2 = arith.constant 0 : index
    %c0_3 = arith.constant 0 : index
    %2 = vector.load %arg2[%c0_2, %c0_3] : memref<128x128xbf16, #tpu.memory_space<vmem>>, vector<128x128xbf16>
    %cst = arith.constant dense<0.000000e+00> : vector<64x128xf32>
    %3 = tpu.matmul %1, %2, %cst {dimension_numbers = #tpu.dot_dimension_numbers<[1], [0], [0], [1], [0, 0, 1, 1], [], []>} : vector<64x128xbf16>, vector<128x128xbf16>, vector<64x128xf32> -> vector<64x128xf32>
    %c0_4 = arith.constant 0 : index
    %c0_5 = arith.constant 0 : index
    %4 = vector.load %arg7[%c0_4, %c0_5] : memref<1x1024xf32, #tpu.memory_space<vmem>>, vector<1x128xf32>
    %5 = vector.broadcast %4 : vector<1x128xf32> to vector<64x128xf32>
    %6 = arith.addf %3, %5 : vector<64x128xf32>
    %7 = math.tanh %6 : vector<64x128xf32>
    %8 = arith.truncf %7 : vector<64x128xf32> to vector<64x128xbf16>
    %c0_6 = arith.constant 0 : index
    %c0_7 = arith.constant 0 : index
    %9 = vector.load %arg3[%c0_6, %c0_7] : memref<128x512xbf16, #tpu.memory_space<vmem>>, vector<128x512xbf16>
    %cst_8 = arith.constant dense<0.000000e+00> : vector<64x512xf32>
    %10 = tpu.matmul %8, %9, %cst_8 {dimension_numbers = #tpu.dot_dimension_numbers<[1], [0], [0], [1], [0, 0, 1, 1], [], []>} : vector<64x128xbf16>, vector<128x512xbf16>, vector<64x512xf32> -> vector<64x512xf32>
    %c0_9 = arith.constant 0 : index
    %c128 = arith.constant 128 : index
    %11 = vector.load %arg7[%c0_9, %c128] : memref<1x1024xf32, #tpu.memory_space<vmem>>, vector<1x512xf32>
    %12 = vector.broadcast %11 : vector<1x512xf32> to vector<64x512xf32>
    %13 = arith.addf %10, %12 : vector<64x512xf32>
    %cst_10 = arith.constant 0.000000e+00 : f32
    %14 = vector.broadcast %cst_10 : f32 to vector<64x512xf32>
    %15 = arith.maximumf %13, %14 : vector<64x512xf32>
    %16 = arith.truncf %15 : vector<64x512xf32> to vector<64x512xbf16>
    %c0_11 = arith.constant 0 : index
    %c0_12 = arith.constant 0 : index
    %17 = vector.load %arg4[%c0_11, %c0_12] : memref<512x128xbf16, #tpu.memory_space<vmem>>, vector<512x128xbf16>
    %cst_13 = arith.constant dense<0.000000e+00> : vector<64x128xf32>
    %18 = tpu.matmul %16, %17, %cst_13 {dimension_numbers = #tpu.dot_dimension_numbers<[1], [0], [0], [1], [0, 0, 1, 1], [], []>} : vector<64x512xbf16>, vector<512x128xbf16>, vector<64x128xf32> -> vector<64x128xf32>
    %c0_14 = arith.constant 0 : index
    %c640 = arith.constant 640 : index
    %19 = vector.load %arg7[%c0_14, %c640] : memref<1x1024xf32, #tpu.memory_space<vmem>>, vector<1x128xf32>
    %20 = vector.broadcast %19 : vector<1x128xf32> to vector<64x128xf32>
    %21 = arith.addf %18, %20 : vector<64x128xf32>
    %cst_15 = arith.constant 0.000000e+00 : f32
    %22 = vector.broadcast %cst_15 : f32 to vector<64x128xf32>
    %23 = arith.maximumf %21, %22 : vector<64x128xf32>
    %24 = arith.truncf %23 : vector<64x128xf32> to vector<64x128xbf16>
    %c0_16 = arith.constant 0 : index
    %c0_17 = arith.constant 0 : index
    %25 = vector.load %arg5[%c0_16, %c0_17] : memref<128x128xbf16, #tpu.memory_space<vmem>>, vector<128x128xbf16>
    %cst_18 = arith.constant dense<0.000000e+00> : vector<64x128xf32>
    %26 = tpu.matmul %24, %25, %cst_18 {dimension_numbers = #tpu.dot_dimension_numbers<[1], [0], [0], [1], [0, 0, 1, 1], [], []>} : vector<64x128xbf16>, vector<128x128xbf16>, vector<64x128xf32> -> vector<64x128xf32>
    %c0_19 = arith.constant 0 : index
    %c768 = arith.constant 768 : index
    %27 = vector.load %arg7[%c0_19, %c768] : memref<1x1024xf32, #tpu.memory_space<vmem>>, vector<1x128xf32>
    %28 = vector.broadcast %27 : vector<1x128xf32> to vector<64x128xf32>
    %29 = arith.addf %26, %28 : vector<64x128xf32>
    %cst_20 = arith.constant 0.000000e+00 : f32
    %30 = vector.broadcast %cst_20 : f32 to vector<64x128xf32>
    %31 = arith.maximumf %29, %30 : vector<64x128xf32>
    %32 = arith.truncf %31 : vector<64x128xf32> to vector<64x128xbf16>
    %c0_21 = arith.constant 0 : index
    %c0_22 = arith.constant 0 : index
    %33 = vector.load %arg6[%c0_21, %c0_22] : memref<128x128xbf16, #tpu.memory_space<vmem>>, vector<128x128xbf16>
    %cst_23 = arith.constant dense<0.000000e+00> : vector<64x128xf32>
    %34 = tpu.matmul %32, %33, %cst_23 {dimension_numbers = #tpu.dot_dimension_numbers<[1], [0], [0], [1], [0, 0, 1, 1], [], []>} : vector<64x128xbf16>, vector<128x128xbf16>, vector<64x128xf32> -> vector<64x128xf32>
    %c0_24 = arith.constant 0 : index
    %c896 = arith.constant 896 : index
    %35 = vector.load %arg7[%c0_24, %c896] : memref<1x1024xf32, #tpu.memory_space<vmem>>, vector<1x128xf32>
    %36 = vector.broadcast %35 : vector<1x128xf32> to vector<64x128xf32>
    %37 = arith.addf %34, %36 : vector<64x128xf32>
    %38 = math.tanh %37 : vector<64x128xf32>
    %39 = vector.broadcast %0 : f32 to vector<64x128xf32>
    %40 = arith.mulf %38, %39 : vector<64x128xf32>
    %c0_25 = arith.constant 0 : index
    %c0_26 = arith.constant 0 : index
    %41 = vector.load %arg9[%c0_25, %c0_26] : memref<64x128xf32, #tpu.memory_space<vmem>>, vector<64x128xf32>
    tpu.vector_store %arg9[%c0_25, %c0_26], %40 {strides = array<i32>} : memref<64x128xf32, #tpu.memory_space<vmem>>, vector<64x128xf32>,
    return
  }
  func.func @transform_0(%arg0: i32) -> (i32, i32) {
    %c0_i32 = arith.constant 0 : i32
    %c0_i32_0 = arith.constant 0 : i32
    return %arg0, %c0_i32 : i32, i32
  }
  func.func @transform_1(%arg0: i32) -> (i32, i32) {
    %c0_i32 = arith.constant 0 : i32
    %c0_i32_0 = arith.constant 0 : i32
    %c0_i32_1 = arith.constant 0 : i32
    return %c0_i32, %c0_i32_0 : i32, i32
  }
  func.func @transform_2(%arg0: i32) -> (i32, i32) {
    %c0_i32 = arith.constant 0 : i32
    %c0_i32_0 = arith.constant 0 : i32
    %c0_i32_1 = arith.constant 0 : i32
    return %c0_i32, %c0_i32_0 : i32, i32
  }
  func.func @transform_3(%arg0: i32) -> (i32, i32) {
    %c0_i32 = arith.constant 0 : i32
    %c0_i32_0 = arith.constant 0 : i32
    %c0_i32_1 = arith.constant 0 : i32
    return %c0_i32, %c0_i32_0 : i32, i32
  }
  func.func @transform_4(%arg0: i32) -> (i32, i32) {
    %c0_i32 = arith.constant 0 : i32
    %c0_i32_0 = arith.constant 0 : i32
    %c0_i32_1 = arith.constant 0 : i32
    return %c0_i32, %c0_i32_0 : i32, i32
  }
  func.func @transform_5(%arg0: i32) -> (i32, i32) {
    %c0_i32 = arith.constant 0 : i32
    %c0_i32_0 = arith.constant 0 : i32
    %c0_i32_1 = arith.constant 0 : i32
    return %c0_i32, %c0_i32_0 : i32, i32
  }
  func.func @transform_6(%arg0: i32) -> (i32, i32) {
    %c0_i32 = arith.constant 0 : i32
    %c0_i32_0 = arith.constant 0 : i32
    %c0_i32_1 = arith.constant 0 : i32
    return %c0_i32, %c0_i32_0 : i32, i32
  }
  func.func @transform_7(%arg0: i32) -> i32 {
    %c0_i32 = arith.constant 0 : i32
    %c0_i32_0 = arith.constant 0 : i32
    return %c0_i32 : i32
  }
  func.func @transform_8(%arg0: i32) -> (i32, i32) {
    %c0_i32 = arith.constant 0 : i32
    %c0_i32_0 = arith.constant 0 : i32
    return %arg0, %c0_i32 : i32, i32
  }
}

</mosaic_0001>

<llo_original>
// kernel: tpu_custom_call.1
$region0: #{tpu_custom_call.1}
  #allocation0 [shape = 'u32[]', space=smem, size = 0x4, offset = 0x4, fixed_abs, tag = 'smem constant byte address 0x4 - core index']
  #allocation1 [shape = 'u32[72,128]{1,0:T(1,128)}', space=vmem, size = 0x9000, scoped, tag = 'internal scratch']
  #allocation2 [shape = 'f32[1]{0:T(128)S(6)}', space=smem, size = 0x200, scoped, tag = 'scoped memory for tpu_custom_call.1']
  %s0 = inlined_call_operand.hbm [shape: bf16[64,128], index: 0, kind: input, shape index: {}]
  %s1 = inlined_call_operand.hbm [shape: bf16[128,128], index: 1, kind: input, shape index: {}]
  %s2 = inlined_call_operand.hbm [shape: bf16[128,512], index: 2, kind: input, shape index: {}]
  %s3 = inlined_call_operand.hbm [shape: bf16[512,128], index: 3, kind: input, shape index: {}]
  %s4 = inlined_call_operand.hbm [shape: bf16[128,128], index: 4, kind: input, shape index: {}]
  %s5 = inlined_call_operand.hbm [shape: bf16[128,128], index: 5, kind: input, shape index: {}]
  %s6 = inlined_call_operand.hbm [shape: f32[1,1024], index: 6, kind: input, shape index: {}]
  %s7 = inlined_call_operand.<no memory space> [shape: f32[1], index: 7, kind: input, shape index: {}]
  %s8 = inlined_call_operand.hbm [shape: f32[64,128], index: 8, kind: output, shape index: {}]
  %s9 = sld [smem:[#allocation0]]
  $region70: #{tpu_custom_call.1} parent=0
    _
  %s11 = ssub.s32 1, %s9
  %s12 = scalar_select 0, %s11, %s9
  %13 = sst [smem:[#allocation2]] %s7
  $region1: #{tpu_custom_call.1} parent=0
    #allocation3 [shape = 'u8[16384]{0}', space=vmem, size = 0x4000, scoped, tag = 'input window, operand 0, single buffered']
    #allocation4 [shape = 's32[1]{0}', space=sflag, size = 0x4, scoped, tag = 'scoped memory for tpu_custom_call.1']
    #allocation5 [shape = 's32[1]{0}', space=sflag, size = 0x4, scoped, tag = 'scoped memory for tpu_custom_call.1']
    #allocation6 [shape = 'u8[32768]{0}', space=vmem, size = 0x8000, scoped, tag = 'input window, operand 1, single buffered']
    #allocation7 [shape = 's32[1]{0}', space=sflag, size = 0x4, scoped, tag = 'scoped memory for tpu_custom_call.1']
    #allocation8 [shape = 'u8[131072]{0}', space=vmem, size = 0x20000, scoped, tag = 'input window, operand 2, single buffered']
    #allocation9 [shape = 'u8[131072]{0}', space=vmem, size = 0x20000, scoped, tag = 'input window, operand 3, single buffered']
    #allocation10 [shape = 's32[1]{0}', space=sflag, size = 0x4, scoped, tag = 'scoped memory for tpu_custom_call.1']
    #allocation11 [shape = 'u8[32768]{0}', space=vmem, size = 0x8000, scoped, tag = 'input window, operand 4, single buffered']
    #allocation12 [shape = 'u8[32768]{0}', space=vmem, size = 0x8000, scoped, tag = 'input window, operand 5, single buffered']
    #allocation13 [shape = 's32[1]{0}', space=sflag, size = 0x4, scoped, tag = 'scoped memory for tpu_custom_call.1']
    #allocation14 [shape = 'u8[4096]{0}', space=vmem, size = 0x1000, scoped, tag = 'input window, operand 6, single buffered']
    #allocation15 [shape = 'u8[32768]{0}', space=vmem, size = 0x8000, scoped, tag = 'output window, operand 0, single buffered']
    %14 = vsyncpa [#allocation4], 0
    %15 = vsyncpa [#allocation7], 0
    %16 = vsyncpa [#allocation10], 0
    %17 = vsyncpa [#allocation13], 0
    %18 = vsyncpa [#allocation5], 0
    // Predicated region
    $region2: #{tpu_custom_call.1} parent=1 // pred_check
      _
    $region3: #{tpu_custom_call.1} parent=1 // pred_check_branch
      %20 = sbr.rel (0) target = $region5
    $region4: #{tpu_custom_call.1} parent=1 // pred_region
      %22 = vsyncadd [#allocation4], 0
      %s23 = sshll.u32 %s0, 4
      %s24 = int_to_ptr.hbm [resolvable:$true] %s23
      %s25 = sshll.u32 [#allocation3], 4
      %s26 = int_to_ptr.vmem [resolvable:$true] %s25
      %31 = dma.hbm_to_vmem [thread:$0]  %s24, 512, %s26, [#allocation4], 64, 64, 4
    $region5: #{tpu_custom_call.1} parent=1 // pred_fallthru
      _
    // Predicated region
    $region6: #{tpu_custom_call.1} parent=1 // pred_check
      _
    $region7: #{tpu_custom_call.1} parent=1 // pred_check_branch
      %33 = sbr.rel (0) target = $region9
    $region8: #{tpu_custom_call.1} parent=1 // pred_region
      %35 = vsyncadd [#allocation7], 0
      %s36 = sshll.u32 %s1, 4
      %s37 = int_to_ptr.hbm [resolvable:$true] %s36
      %s38 = sshll.u32 [#allocation6], 4
      %s39 = int_to_ptr.vmem [resolvable:$true] %s38
      %44 = dma.hbm_to_vmem [thread:$0]  %s37, 1024, %s39, [#allocation7], 64, 64, 4
    $region9: #{tpu_custom_call.1} parent=1 // pred_fallthru
      _
    // Predicated region
    $region10: #{tpu_custom_call.1} parent=1 // pred_check
      _
    $region11: #{tpu_custom_call.1} parent=1 // pred_check_branch
      %46 = sbr.rel (0) target = $region13
    $region12: #{tpu_custom_call.1} parent=1 // pred_region
      %48 = vsyncadd [#allocation7], 0
      %s49 = sshll.u32 %s2, 4
      %s50 = int_to_ptr.hbm [resolvable:$true] %s49
      %s51 = sshll.u32 [#allocation8], 4
      %s52 = int_to_ptr.vmem [resolvable:$true] %s51
      %57 = dma.hbm_to_vmem [thread:$0]  %s50, 4096, %s52, [#allocation7], 256, 256, 16
    $region13: #{tpu_custom_call.1} parent=1 // pred_fallthru
      _
    // Predicated region
    $region14: #{tpu_custom_call.1} parent=1 // pred_check
      _
    $region15: #{tpu_custom_call.1} parent=1 // pred_check_branch
      %59 = sbr.rel (0) target = $region17
    $region16: #{tpu_custom_call.1} parent=1 // pred_region
      %61 = vsyncadd [#allocation10], 0
      %s62 = sshll.u32 %s3, 4
      %s63 = int_to_ptr.hbm [resolvable:$true] %s62
      %s64 = sshll.u32 [#allocation9], 4
      %s65 = int_to_ptr.vmem [resolvable:$true] %s64
      %70 = dma.hbm_to_vmem [thread:$0]  %s63, 4096, %s65, [#allocation10], 64, 64, 4
    $region17: #{tpu_custom_call.1} parent=1 // pred_fallthru
      _
    // Predicated region
    $region18: #{tpu_custom_call.1} parent=1 // pred_check
      _
    $region19: #{tpu_custom_call.1} parent=1 // pred_check_branch
      %72 = sbr.rel (0) target = $region21
    $region20: #{tpu_custom_call.1} parent=1 // pred_region
      %74 = vsyncadd [#allocation10], 0
      %s75 = sshll.u32 %s4, 4
      %s76 = int_to_ptr.hbm [resolvable:$true] %s75
      %s77 = sshll.u32 [#allocation11], 4
      %s78 = int_to_ptr.vmem [resolvable:$true] %s77
      %83 = dma.hbm_to_vmem [thread:$0]  %s76, 1024, %s78, [#allocation10], 64, 64, 4
    $region21: #{tpu_custom_call.1} parent=1 // pred_fallthru
      _
    // Predicated region
    $region22: #{tpu_custom_call.1} parent=1 // pred_check
      _
    $region23: #{tpu_custom_call.1} parent=1 // pred_check_branch
      %85 = sbr.rel (0) target = $region25
    $region24: #{tpu_custom_call.1} parent=1 // pred_region
      %87 = vsyncadd [#allocation13], 0
      %s88 = sshll.u32 %s5, 4
      %s89 = int_to_ptr.hbm [resolvable:$true] %s88
      %s90 = sshll.u32 [#allocation12], 4
      %s91 = int_to_ptr.vmem [resolvable:$true] %s90
      %96 = dma.hbm_to_vmem [thread:$0]  %s89, 1024, %s91, [#allocation13], 64, 64, 4
    $region25: #{tpu_custom_call.1} parent=1 // pred_fallthru
      _
    // Predicated region
    $region26: #{tpu_custom_call.1} parent=1 // pred_check
      _
    $region27: #{tpu_custom_call.1} parent=1 // pred_check_branch
      %98 = sbr.rel (0) target = $region29
    $region28: #{tpu_custom_call.1} parent=1 // pred_region
      %100 = vsyncadd [#allocation13], 0
      %s102 = sshll.u32 %s6, 4
      %s103 = int_to_ptr.hbm [resolvable:$true] %s102
      %s104 = sshll.u32 [#allocation14], 4
      %s105 = int_to_ptr.vmem [resolvable:$true] %s104
      %107 = dma.hbm_to_vmem [thread:$0]  %s103, 128, %s105, [#allocation13]
    $region29: #{tpu_custom_call.1} parent=1 // pred_fallthru
      _
    // Predicated region
    $region30: #{tpu_custom_call.1} parent=1 // pred_check
      _
    $region31: #{tpu_custom_call.1} parent=1 // pred_check_branch
      %109 = sbr.rel (0) target = $region33
    $region32: #{tpu_custom_call.1} parent=1 // pred_region
      _
    $region33: #{tpu_custom_call.1} parent=1 // pred_fallthru
      _
    // Predicated region
    $region34: #{tpu_custom_call.1} parent=1 // pred_check
      _
    $region35: #{tpu_custom_call.1} parent=1 // pred_check_branch
      %111 = sbr.rel (0) target = $region37
    $region36: #{tpu_custom_call.1} parent=1 // pred_region
      %113 = dma.done [#allocation4], 512
    $region37: #{tpu_custom_call.1} parent=1 // pred_fallthru
      _
    // Predicated region
    $region38: #{tpu_custom_call.1} parent=1 // pred_check
      _
    $region39: #{tpu_custom_call.1} parent=1 // pred_check_branch
      %115 = sbr.rel (0) target = $region41
    $region40: #{tpu_custom_call.1} parent=1 // pred_region
      %117 = dma.done [#allocation7], 1024
    $region41: #{tpu_custom_call.1} parent=1 // pred_fallthru
      _
    // Predicated region
    $region42: #{tpu_custom_call.1} parent=1 // pred_check
      _
    $region43: #{tpu_custom_call.1} parent=1 // pred_check_branch
      %119 = sbr.rel (0) target = $region45
    $region44: #{tpu_custom_call.1} parent=1 // pred_region
      %121 = dma.done [#allocation7], 4096
    $region45: #{tpu_custom_call.1} parent=1 // pred_fallthru
      _
    // Predicated region
    $region46: #{tpu_custom_call.1} parent=1 // pred_check
      _
    $region47: #{tpu_custom_call.1} parent=1 // pred_check_branch
      %123 = sbr.rel (0) target = $region49
    $region48: #{tpu_custom_call.1} parent=1 // pred_region
      %125 = dma.done [#allocation10], 4096
    $region49: #{tpu_custom_call.1} parent=1 // pred_fallthru
      _
    // Predicated region
    $region50: #{tpu_custom_call.1} parent=1 // pred_check
      _
    $region51: #{tpu_custom_call.1} parent=1 // pred_check_branch
      %127 = sbr.rel (0) target = $region53
    $region52: #{tpu_custom_call.1} parent=1 // pred_region
      %129 = dma.done [#allocation10], 1024
    $region53: #{tpu_custom_call.1} parent=1 // pred_fallthru
      _
    // Predicated region
    $region54: #{tpu_custom_call.1} parent=1 // pred_check
      _
    $region55: #{tpu_custom_call.1} parent=1 // pred_check_branch
      %131 = sbr.rel (0) target = $region57
    $region56: #{tpu_custom_call.1} parent=1 // pred_region
      %133 = dma.done [#allocation13], 1024
    $region57: #{tpu_custom_call.1} parent=1 // pred_fallthru
      _
    // Predicated region
    $region58: #{tpu_custom_call.1} parent=1 // pred_check
      _
    $region59: #{tpu_custom_call.1} parent=1 // pred_check_branch
      %135 = sbr.rel (0) target = $region61
    $region60: #{tpu_custom_call.1} parent=1 // pred_region
      %137 = dma.done [#allocation13], 128
    $region61: #{tpu_custom_call.1} parent=1 // pred_fallthru
      _
    %s138 = sld [smem:[#allocation2]]
    %v139 = vld [vmem:[#allocation3] sm:$0xf]
    %v140 = vld [vmem:[#allocation3 + $0x4] sm:$0xf]
    %v141 = vld [vmem:[#allocation3 + $0x8] sm:$0xf]
    %v142 = vld [vmem:[#allocation3 + $0xc] sm:$0xf]
    %v143 = vld [vmem:[#allocation3 + $0x10] sm:$0xf]
    %v144 = vld [vmem:[#allocation3 + $0x14] sm:$0xf]
    %v145 = vld [vmem:[#allocation3 + $0x18] sm:$0xf]
    %v146 = vld [vmem:[#allocation3 + $0x1c] sm:$0xf]
    %v147 = vld [vmem:[#allocation6] sm:$0xf]
    %v148 = vld [vmem:[#allocation6 + $0x4] sm:$0xf]
    %v149 = vld [vmem:[#allocation6 + $0x8] sm:$0xf]
    %v150 = vld [vmem:[#allocation6 + $0xc] sm:$0xf]
    %v151 = vld [vmem:[#allocation6 + $0x10] sm:$0xf]
    %v152 = vld [vmem:[#allocation6 + $0x14] sm:$0xf]
    %v153 = vld [vmem:[#allocation6 + $0x18] sm:$0xf]
    %v154 = vld [vmem:[#allocation6 + $0x1c] sm:$0xf]
    %v155 = vld [vmem:[#allocation6 + $0x20] sm:$0xf]
    %v156 = vld [vmem:[#allocation6 + $0x24] sm:$0xf]
    %v157 = vld [vmem:[#allocation6 + $0x28] sm:$0xf]
    %v158 = vld [vmem:[#allocation6 + $0x2c] sm:$0xf]
    %v159 = vld [vmem:[#allocation6 + $0x30] sm:$0xf]
    %v160 = vld [vmem:[#allocation6 + $0x34] sm:$0xf]
    %v161 = vld [vmem:[#allocation6 + $0x38] sm:$0xf]
    %v162 = vld [vmem:[#allocation6 + $0x3c] sm:$0xf]
    %v163 = vld [vmem:[#allocation14] sm:$0x1]
    %v165 = vperm.slane %v163, 0
    %v175 = vunpack.c.l.b16 %v139
    %v176 = vunpack.c.l.b16 %v140
    %v177 = vunpack.c.l.b16 %v141
    %v178 = vunpack.c.l.b16 %v142
    %v179 = vunpack.c.l.b16 %v143
    %v180 = vunpack.c.l.b16 %v144
    %v181 = vunpack.c.l.b16 %v145
    %v182 = vunpack.c.l.b16 %v146
    %v183 = vpack.c.b16 %v176, %v175
    %v184 = vpack.c.b16 %v178, %v177
    %v185 = vpack.c.b16 %v180, %v179
    %v186 = vpack.c.b16 %v182, %v181
    %v207 = vunpack.c.l.b16 %v147
    %v208 = vunpack.c.l.b16 %v148
    %v209 = vunpack.c.l.b16 %v149
    %v210 = vunpack.c.l.b16 %v150
    %v211 = vunpack.c.l.b16 %v151
    %v212 = vunpack.c.l.b16 %v152
    %v213 = vunpack.c.l.b16 %v153
    %v214 = vunpack.c.l.b16 %v154
    %v215 = vunpack.c.l.b16 %v155
    %v216 = vunpack.c.l.b16 %v156
    %v217 = vunpack.c.l.b16 %v157
    %v218 = vunpack.c.l.b16 %v158
    %v219 = vunpack.c.l.b16 %v159
    %v220 = vunpack.c.l.b16 %v160
    %v221 = vunpack.c.l.b16 %v161
    %v222 = vunpack.c.l.b16 %v162
    %v223 = vpack.c.b16 %v208, %v207
    %v224 = vpack.c.b16 %v210, %v209
    %v225 = vpack.c.b16 %v212, %v211
    %v226 = vpack.c.b16 %v214, %v213
    %v227 = vpack.c.b16 %v216, %v215
    %v228 = vpack.c.b16 %v218, %v217
    %v229 = vpack.c.b16 %v220, %v219
    %v230 = vpack.c.b16 %v222, %v221
    %239 = vmatpush.bf16.msra.mxu0 %v230
    %240 = vmatpush.bf16.msra.mxu0 %v229
    %241 = vmatpush.bf16.msra.mxu0 %v228
    %242 = vmatpush.bf16.msra.mxu0 %v227
    %243 = vmatpush.bf16.msra.mxu0 %v226
    %244 = vmatpush.bf16.msra.mxu0 %v225
    %245 = vmatpush.bf16.msra.mxu0 %v224
    %246 = vmatpush.bf16.msra.mxu0 %v223
    %247 = vmatmul.bf16.gmra.mxu0 %v183
    %v248 = vpop.f32.mrf.mxu0
    %v249 = vadd.f32 %v165, %v248
    %v250 = vpop.f32.mrf.mxu0
    %v251 = vadd.f32 %v165, %v250
    %252 = vmatmul.bf16.gmra.mxu0 %v184
    %v253 = vpop.f32.mrf.mxu0
    %v254 = vadd.f32 %v165, %v253
    %v255 = vpop.f32.mrf.mxu0
    %v256 = vadd.f32 %v165, %v255
    %257 = vmatmul.bf16.gmra.mxu0 %v185
    %v258 = vpop.f32.mrf.mxu0
    %v259 = vadd.f32 %v165, %v258
    %v260 = vpop.f32.mrf.mxu0
    %v261 = vadd.f32 %v165, %v260
    %262 = vmatmul.bf16.gmra.mxu0 %v186
    %v263 = vpop.f32.mrf.mxu0
    %v264 = vadd.f32 %v165, %v263
    %v265 = vpop.f32.mrf.mxu0
    %v266 = vadd.f32 %v165, %v265
    %267 = vdwg.mxu0
    %v268 = vtanh.pop %v249
    %v269 = vtanh.pop %v251
    %v270 = vtanh.pop %v254
    %v271 = vtanh.pop %v256
    %v272 = vtanh.pop %v259
    %v273 = vtanh.pop %v261
    %v274 = vtanh.pop %v264
    %v275 = vtanh.pop %v266
    %v276 = vpack.c.bf16 %v269, %v268
    %v277 = vpack.c.bf16 %v271, %v270
    %v278 = vpack.c.bf16 %v273, %v272
    %v279 = vpack.c.bf16 %v275, %v274
    %v280 = vld [vmem:[#allocation8] sm:$0xff]
    %v281 = vld [vmem:[#allocation8 + $0x8] sm:$0xff]
    %v282 = vld [vmem:[#allocation8 + $0x10] sm:$0xff]
    %v283 = vld [vmem:[#allocation8 + $0x18] sm:$0xff]
    %v284 = vld [vmem:[#allocation8 + $0x20] sm:$0xff]
    %v285 = vld [vmem:[#allocation8 + $0x28] sm:$0xff]
    %v286 = vld [vmem:[#allocation8 + $0x30] sm:$0xff]
    %v287 = vld [vmem:[#allocation8 + $0x38] sm:$0xff]
    %v288 = vld [vmem:[#allocation8 + $0x40] sm:$0xff]
    %v289 = vld [vmem:[#allocation8 + $0x48] sm:$0xff]
    %v290 = vld [vmem:[#allocation8 + $0x50] sm:$0xff]
    %v291 = vld [vmem:[#allocation8 + $0x58] sm:$0xff]
    %v292 = vld [vmem:[#allocation8 + $0x60] sm:$0xff]
    %v293 = vld [vmem:[#allocation8 + $0x68] sm:$0xff]
    %v294 = vld [vmem:[#allocation8 + $0x70] sm:$0xff]
    %v295 = vld [vmem:[#allocation8 + $0x78] sm:$0xff]
    %v296 = vld [vmem:[#allocation8 + $0x80] sm:$0xff]
    %v297 = vld [vmem:[#allocation8 + $0x88] sm:$0xff]
    %v298 = vld [vmem:[#allocation8 + $0x90] sm:$0xff]
    %v299 = vld [vmem:[#allocation8 + $0x98] sm:$0xff]
    %v300 = vld [vmem:[#allocation8 + $0xa0] sm:$0xff]
    %v301 = vld [vmem:[#allocation8 + $0xa8] sm:$0xff]
    %v302 = vld [vmem:[#allocation8 + $0xb0] sm:$0xff]
    %v303 = vld [vmem:[#allocation8 + $0xb8] sm:$0xff]
    %v304 = vld [vmem:[#allocation8 + $0xc0] sm:$0xff]
    %v305 = vld [vmem:[#allocation8 + $0xc8] sm:$0xff]
    %v306 = vld [vmem:[#allocation8 + $0xd0] sm:$0xff]
    %v307 = vld [vmem:[#allocation8 + $0xd8] sm:$0xff]
    %v308 = vld [vmem:[#allocation8 + $0xe0] sm:$0xff]
    %v309 = vld [vmem:[#allocation8 + $0xe8] sm:$0xff]
    %v310 = vld [vmem:[#allocation8 + $0xf0] sm:$0xff]
    %v311 = vld [vmem:[#allocation8 + $0xf8] sm:$0xff]
    %v312 = vld [vmem:[#allocation14 + $0x1] sm:$0xf]
    %v314 = vperm.slane %v312, 0
    %v315 = vperm.slane %v312, 1
    %v316 = vperm.slane %v312, 2
    %v317 = vperm.slane %v312, 3
    %v354 = vunpack.c.l.b16 %v280
    %v355 = vunpack.c.h.b16 %v280
    %v356 = vunpack.c.l.b16 %v281
    %v357 = vunpack.c.h.b16 %v281
    %v358 = vunpack.c.l.b16 %v282
    %v359 = vunpack.c.h.b16 %v282
    %v360 = vunpack.c.l.b16 %v283
    %v361 = vunpack.c.h.b16 %v283
    %v362 = vunpack.c.l.b16 %v284
    %v363 = vunpack.c.h.b16 %v284
    %v364 = vunpack.c.l.b16 %v285
    %v365 = vunpack.c.h.b16 %v285
    %v366 = vunpack.c.l.b16 %v286
    %v367 = vunpack.c.h.b16 %v286
    %v368 = vunpack.c.l.b16 %v287
    %v369 = vunpack.c.h.b16 %v287
    %v370 = vunpack.c.l.b16 %v288
    %v371 = vunpack.c.h.b16 %v288
    %v372 = vunpack.c.l.b16 %v289
    %v373 = vunpack.c.h.b16 %v289
    %v374 = vunpack.c.l.b16 %v290
    %v375 = vunpack.c.h.b16 %v290
    %v376 = vunpack.c.l.b16 %v291
    %v377 = vunpack.c.h.b16 %v291
    %v378 = vunpack.c.l.b16 %v292
    %v379 = vunpack.c.h.b16 %v292
    %v380 = vunpack.c.l.b16 %v293
    %v381 = vunpack.c.h.b16 %v293
    %v382 = vunpack.c.l.b16 %v294
    %v383 = vunpack.c.h.b16 %v294
    %v384 = vunpack.c.l.b16 %v295
    %v385 = vunpack.c.h.b16 %v295
    %v386 = vunpack.c.l.b16 %v296
    %v387 = vunpack.c.h.b16 %v296
    %v388 = vunpack.c.l.b16 %v297
    %v389 = vunpack.c.h.b16 %v297
    %v390 = vunpack.c.l.b16 %v298
    %v391 = vunpack.c.h.b16 %v298
    %v392 = vunpack.c.l.b16 %v299
    %v393 = vunpack.c.h.b16 %v299
    %v394 = vunpack.c.l.b16 %v300
    %v395 = vunpack.c.h.b16 %v300
    %v396 = vunpack.c.l.b16 %v301
    %v397 = vunpack.c.h.b16 %v301
    %v398 = vunpack.c.l.b16 %v302
    %v399 = vunpack.c.h.b16 %v302
    %v400 = vunpack.c.l.b16 %v303
    %v401 = vunpack.c.h.b16 %v303
    %v402 = vunpack.c.l.b16 %v304
    %v403 = vunpack.c.h.b16 %v304
    %v404 = vunpack.c.l.b16 %v305
    %v405 = vunpack.c.h.b16 %v305
    %v406 = vunpack.c.l.b16 %v306
    %v407 = vunpack.c.h.b16 %v306
    %v408 = vunpack.c.l.b16 %v307
    %v409 = vunpack.c.h.b16 %v307
    %v410 = vunpack.c.l.b16 %v308
    %v411 = vunpack.c.h.b16 %v308
    %v412 = vunpack.c.l.b16 %v309
    %v413 = vunpack.c.h.b16 %v309
    %v414 = vunpack.c.l.b16 %v310
    %v415 = vunpack.c.h.b16 %v310
    %v416 = vunpack.c.l.b16 %v311
    %v417 = vunpack.c.h.b16 %v311
    %v418 = vpack.c.b16 %v358, %v354
    %v419 = vpack.c.b16 %v359, %v355
    %v420 = vpack.c.b16 %v360, %v356
    %v421 = vpack.c.b16 %v361, %v357
    %v422 = vpack.c.b16 %v366, %v362
    %v423 = vpack.c.b16 %v367, %v363
    %v424 = vpack.c.b16 %v368, %v364
    %v425 = vpack.c.b16 %v369, %v365
    %v426 = vpack.c.b16 %v374, %v370
    %v427 = vpack.c.b16 %v375, %v371
    %v428 = vpack.c.b16 %v376, %v372
    %v429 = vpack.c.b16 %v377, %v373
    %v430 = vpack.c.b16 %v382, %v378
    %v431 = vpack.c.b16 %v383, %v379
    %v432 = vpack.c.b16 %v384, %v380
    %v433 = vpack.c.b16 %v385, %v381
    %v434 = vpack.c.b16 %v390, %v386
    %v435 = vpack.c.b16 %v391, %v387
    %v436 = vpack.c.b16 %v392, %v388
    %v437 = vpack.c.b16 %v393, %v389
    %v438 = vpack.c.b16 %v398, %v394
    %v439 = vpack.c.b16 %v399, %v395
    %v440 = vpack.c.b16 %v400, %v396
    %v441 = vpack.c.b16 %v401, %v397
    %v442 = vpack.c.b16 %v406, %v402
    %v443 = vpack.c.b16 %v407, %v403
    %v444 = vpack.c.b16 %v408, %v404
    %v445 = vpack.c.b16 %v409, %v405
    %v446 = vpack.c.b16 %v414, %v410
    %v447 = vpack.c.b16 %v415, %v411
    %v448 = vpack.c.b16 %v416, %v412
    %v449 = vpack.c.b16 %v417, %v413
    %482 = vmatpush.bf16.msra.mxu0 %v446
    %483 = vmatpush.bf16.msra.mxu0 %v442
    %484 = vmatpush.bf16.msra.mxu0 %v438
    %485 = vmatpush.bf16.msra.mxu0 %v434
    %486 = vmatpush.bf16.msra.mxu0 %v430
    %487 = vmatpush.bf16.msra.mxu0 %v426
    %488 = vmatpush.bf16.msra.mxu0 %v422
    %489 = vmatpush.bf16.msra.mxu0 %v418
    %490 = vmatmul.bf16.gmra.mxu0 %v276
    %v491 = vpop.f32.mrf.mxu0
    %v492 = vadd.f32 %v314, %v491
    %v493 = vpop.f32.mrf.mxu0
    %v494 = vadd.f32 %v314, %v493
    %495 = vmatmul.bf16.gmra.mxu0 %v277
    %v496 = vpop.f32.mrf.mxu0
    %v497 = vadd.f32 %v314, %v496
    %v498 = vpop.f32.mrf.mxu0
    %v499 = vadd.f32 %v314, %v498
    %500 = vmatmul.bf16.gmra.mxu0 %v278
    %v501 = vpop.f32.mrf.mxu0
    %v502 = vadd.f32 %v314, %v501
    %v503 = vpop.f32.mrf.mxu0
    %v504 = vadd.f32 %v314, %v503
    %505 = vmatmul.bf16.gmra.mxu0 %v279
    %v506 = vpop.f32.mrf.mxu0
    %v507 = vadd.f32 %v314, %v506
    %v508 = vpop.f32.mrf.mxu0
    %v509 = vadd.f32 %v314, %v508
    %510 = vdwg.mxu0
    %511 = vmatpush.bf16.msra.mxu0 %v447
    %512 = vmatpush.bf16.msra.mxu0 %v443
    %513 = vmatpush.bf16.msra.mxu0 %v439
    %514 = vmatpush.bf16.msra.mxu0 %v435
    %515 = vmatpush.bf16.msra.mxu0 %v431
    %516 = vmatpush.bf16.msra.mxu0 %v427
    %517 = vmatpush.bf16.msra.mxu0 %v423
    %518 = vmatpush.bf16.msra.mxu0 %v419
    %519 = vmatmul.bf16.gmra.mxu0 %v276
    %v520 = vpop.f32.mrf.mxu0
    %v521 = vadd.f32 %v315, %v520
    %v522 = vpop.f32.mrf.mxu0
    %v523 = vadd.f32 %v315, %v522
    %524 = vmatmul.bf16.gmra.mxu0 %v277
    %v525 = vpop.f32.mrf.mxu0
    %v526 = vadd.f32 %v315, %v525
    %v527 = vpop.f32.mrf.mxu0
    %v528 = vadd.f32 %v315, %v527
    %529 = vmatmul.bf16.gmra.mxu0 %v278
    %v530 = vpop.f32.mrf.mxu0
    %v531 = vadd.f32 %v315, %v530
    %v532 = vpop.f32.mrf.mxu0
    %v533 = vadd.f32 %v315, %v532
    %534 = vmatmul.bf16.gmra.mxu0 %v279
    %v535 = vpop.f32.mrf.mxu0
    %v536 = vadd.f32 %v315, %v535
    %v537 = vpop.f32.mrf.mxu0
    %v538 = vadd.f32 %v315, %v537
    %539 = vdwg.mxu0
    %540 = vmatpush.bf16.msra.mxu0 %v448
    %541 = vmatpush.bf16.msra.mxu0 %v444
    %542 = vmatpush.bf16.msra.mxu0 %v440
    %543 = vmatpush.bf16.msra.mxu0 %v436
    %544 = vmatpush.bf16.msra.mxu0 %v432
    %545 = vmatpush.bf16.msra.mxu0 %v428
    %546 = vmatpush.bf16.msra.mxu0 %v424
    %547 = vmatpush.bf16.msra.mxu0 %v420
    %548 = vmatmul.bf16.gmra.mxu0 %v276
    %v549 = vpop.f32.mrf.mxu0
    %v550 = vadd.f32 %v316, %v549
    %v551 = vpop.f32.mrf.mxu0
    %v552 = vadd.f32 %v316, %v551
    %553 = vmatmul.bf16.gmra.mxu0 %v277
    %v554 = vpop.f32.mrf.mxu0
    %v555 = vadd.f32 %v316, %v554
    %v556 = vpop.f32.mrf.mxu0
    %v557 = vadd.f32 %v316, %v556
    %558 = vmatmul.bf16.gmra.mxu0 %v278
    %v559 = vpop.f32.mrf.mxu0
    %v560 = vadd.f32 %v316, %v559
    %v561 = vpop.f32.mrf.mxu0
    %v562 = vadd.f32 %v316, %v561
    %563 = vmatmul.bf16.gmra.mxu0 %v279
    %v564 = vpop.f32.mrf.mxu0
    %v565 = vadd.f32 %v316, %v564
    %v566 = vpop.f32.mrf.mxu0
    %v567 = vadd.f32 %v316, %v566
    %568 = vdwg.mxu0
    %569 = vmatpush.bf16.msra.mxu0 %v449
    %570 = vmatpush.bf16.msra.mxu0 %v445
    %571 = vmatpush.bf16.msra.mxu0 %v441
    %572 = vmatpush.bf16.msra.mxu0 %v437
    %573 = vmatpush.bf16.msra.mxu0 %v433
    %574 = vmatpush.bf16.msra.mxu0 %v429
    %575 = vmatpush.bf16.msra.mxu0 %v425
    %576 = vmatpush.bf16.msra.mxu0 %v421
    %577 = vmatmul.bf16.gmra.mxu0 %v276
    %v578 = vpop.f32.mrf.mxu0
    %v579 = vadd.f32 %v317, %v578
    %v580 = vpop.f32.mrf.mxu0
    %v581 = vadd.f32 %v317, %v580
    %582 = vmatmul.bf16.gmra.mxu0 %v277
    %v583 = vpop.f32.mrf.mxu0
    %v584 = vadd.f32 %v317, %v583
    %v585 = vpop.f32.mrf.mxu0
    %v586 = vadd.f32 %v317, %v585
    %587 = vmatmul.bf16.gmra.mxu0 %v278
    %v588 = vpop.f32.mrf.mxu0
    %v589 = vadd.f32 %v317, %v588
    %v590 = vpop.f32.mrf.mxu0
    %v591 = vadd.f32 %v317, %v590
    %592 = vmatmul.bf16.gmra.mxu0 %v279
    %v593 = vpop.f32.mrf.mxu0
    %v594 = vadd.f32 %v317, %v593
    %v595 = vpop.f32.mrf.mxu0
    %v596 = vadd.f32 %v317, %v595
    %597 = vdwg.mxu0
    %v598 = vmax.f32 %v492, 0.0
    %v599 = vmax.f32 %v521, 0.0
    %v600 = vmax.f32 %v550, 0.0
    %v601 = vmax.f32 %v579, 0.0
    %v602 = vmax.f32 %v494, 0.0
    %v603 = vmax.f32 %v523, 0.0
    %v604 = vmax.f32 %v552, 0.0
    %v605 = vmax.f32 %v581, 0.0
    %v606 = vmax.f32 %v497, 0.0
    %v607 = vmax.f32 %v526, 0.0
    %v608 = vmax.f32 %v555, 0.0
    %v609 = vmax.f32 %v584, 0.0
    %v610 = vmax.f32 %v499, 0.0
    %v611 = vmax.f32 %v528, 0.0
    %v612 = vmax.f32 %v557, 0.0
    %v613 = vmax.f32 %v586, 0.0
    %v614 = vmax.f32 %v502, 0.0
    %v615 = vmax.f32 %v531, 0.0
    %v616 = vmax.f32 %v560, 0.0
    %v617 = vmax.f32 %v589, 0.0
    %v618 = vmax.f32 %v504, 0.0
    %v619 = vmax.f32 %v533, 0.0
    %v620 = vmax.f32 %v562, 0.0
    %v621 = vmax.f32 %v591, 0.0
    %v622 = vmax.f32 %v507, 0.0
    %v623 = vmax.f32 %v536, 0.0
    %v624 = vmax.f32 %v565, 0.0
    %v625 = vmax.f32 %v594, 0.0
    %v626 = vmax.f32 %v509, 0.0
    %v627 = vmax.f32 %v538, 0.0
    %v628 = vmax.f32 %v567, 0.0
    %v629 = vmax.f32 %v596, 0.0
    %v630 = vpack.c.bf16 %v602, %v598
    %v631 = vpack.c.bf16 %v603, %v599
    %v632 = vpack.c.bf16 %v604, %v600
    %v633 = vpack.c.bf16 %v605, %v601
    %v634 = vpack.c.bf16 %v610, %v606
    %v635 = vpack.c.bf16 %v611, %v607
    %v636 = vpack.c.bf16 %v612, %v608
    %v637 = vpack.c.bf16 %v613, %v609
    %v638 = vpack.c.bf16 %v618, %v614
    %v639 = vpack.c.bf16 %v619, %v615
    %v640 = vpack.c.bf16 %v620, %v616
    %v641 = vpack.c.bf16 %v621, %v617
    %v642 = vpack.c.bf16 %v626, %v622
    %v643 = vpack.c.bf16 %v627, %v623
    %v644 = vpack.c.bf16 %v628, %v624
    %v645 = vpack.c.bf16 %v629, %v625
    %v646 = vld [vmem:[#allocation9] sm:$0xf]
    %v647 = vld [vmem:[#allocation9 + $0x4] sm:$0xf]
    %v648 = vld [vmem:[#allocation9 + $0x8] sm:$0xf]
    %v649 = vld [vmem:[#allocation9 + $0xc] sm:$0xf]
    %v650 = vld [vmem:[#allocation9 + $0x10] sm:$0xf]
    %v651 = vld [vmem:[#allocation9 + $0x14] sm:$0xf]
    %v652 = vld [vmem:[#allocation9 + $0x18] sm:$0xf]
    %v653 = vld [vmem:[#allocation9 + $0x1c] sm:$0xf]
    %v654 = vld [vmem:[#allocation9 + $0x20] sm:$0xf]
    %v655 = vld [vmem:[#allocation9 + $0x24] sm:$0xf]
    %v656 = vld [vmem:[#allocation9 + $0x28] sm:$0xf]
    %v657 = vld [vmem:[#allocation9 + $0x2c] sm:$0xf]
    %v658 = vld [vmem:[#allocation9 + $0x30] sm:$0xf]
    %v659 = vld [vmem:[#allocation9 + $0x34] sm:$0xf]
    %v660 = vld [vmem:[#allocation9 + $0x38] sm:$0xf]
    %v661 = vld [vmem:[#allocation9 + $0x3c] sm:$0xf]
    %v662 = vld [vmem:[#allocation9 + $0x40] sm:$0xf]
    %v663 = vld [vmem:[#allocation9 + $0x44] sm:$0xf]
    %v664 = vld [vmem:[#allocation9 + $0x48] sm:$0xf]
    %v665 = vld [vmem:[#allocation9 + $0x4c] sm:$0xf]
    %v666 = vld [vmem:[#allocation9 + $0x50] sm:$0xf]
    %v667 = vld [vmem:[#allocation9 + $0x54] sm:$0xf]
    %v668 = vld [vmem:[#allocation9 + $0x58] sm:$0xf]
    %v669 = vld [vmem:[#allocation9 + $0x5c] sm:$0xf]
    %v670 = vld [vmem:[#allocation9 + $0x60] sm:$0xf]
    %v671 = vld [vmem:[#allocation9 + $0x64] sm:$0xf]
    %v672 = vld [vmem:[#allocation9 + $0x68] sm:$0xf]
    %v673 = vld [vmem:[#allocation9 + $0x6c] sm:$0xf]
    %v674 = vld [vmem:[#allocation9 + $0x70] sm:$0xf]
    %v675 = vld [vmem:[#allocation9 + $0x74] sm:$0xf]
    %v676 = vld [vmem:[#allocation9 + $0x78] sm:$0xf]
    %v677 = vld [vmem:[#allocation9 + $0x7c] sm:$0xf]
    %v678 = vld [vmem:[#allocation9 + $0x80] sm:$0xf]
    %v679 = vld [vmem:[#allocation9 + $0x84] sm:$0xf]
    %v680 = vld [vmem:[#allocation9 + $0x88] sm:$0xf]
    %v681 = vld [vmem:[#allocation9 + $0x8c] sm:$0xf]
    %v682 = vld [vmem:[#allocation9 + $0x90] sm:$0xf]
    %v683 = vld [vmem:[#allocation9 + $0x94] sm:$0xf]
    %v684 = vld [vmem:[#allocation9 + $0x98] sm:$0xf]
    %v685 = vld [vmem:[#allocation9 + $0x9c] sm:$0xf]
    %v686 = vld [vmem:[#allocation9 + $0xa0] sm:$0xf]
    %v687 = vld [vmem:[#allocation9 + $0xa4] sm:$0xf]
    %v688 = vld [vmem:[#allocation9 + $0xa8] sm:$0xf]
    %v689 = vld [vmem:[#allocation9 + $0xac] sm:$0xf]
    %v690 = vld [vmem:[#allocation9 + $0xb0] sm:$0xf]
    %v691 = vld [vmem:[#allocation9 + $0xb4] sm:$0xf]
    %v692 = vld [vmem:[#allocation9 + $0xb8] sm:$0xf]
    %v693 = vld [vmem:[#allocation9 + $0xbc] sm:$0xf]
    %v694 = vld [vmem:[#allocation9 + $0xc0] sm:$0xf]
    %v695 = vld [vmem:[#allocation9 + $0xc4] sm:$0xf]
    %v696 = vld [vmem:[#allocation9 + $0xc8] sm:$0xf]
    %v697 = vld [vmem:[#allocation9 + $0xcc] sm:$0xf]
    %v698 = vld [vmem:[#allocation9 + $0xd0] sm:$0xf]
    %v699 = vld [vmem:[#allocation9 + $0xd4] sm:$0xf]
    %v700 = vld [vmem:[#allocation9 + $0xd8] sm:$0xf]
    %v701 = vld [vmem:[#allocation9 + $0xdc] sm:$0xf]
    %v702 = vld [vmem:[#allocation9 + $0xe0] sm:$0xf]
    %v703 = vld [vmem:[#allocation9 + $0xe4] sm:$0xf]
    %v704 = vld [vmem:[#allocation9 + $0xe8] sm:$0xf]
    %v705 = vld [vmem:[#allocation9 + $0xec] sm:$0xf]
    %v706 = vld [vmem:[#allocation9 + $0xf0] sm:$0xf]
    %v707 = vld [vmem:[#allocation9 + $0xf4] sm:$0xf]
    %v708 = vld [vmem:[#allocation9 + $0xf8] sm:$0xf]
    %v709 = vld [vmem:[#allocation9 + $0xfc] sm:$0xf]
    %v710 = vld [vmem:[#allocation14 + $0x5] sm:$0x1]
    %v712 = vperm.slane %v710, 0
    %v778 = vunpack.c.l.b16 %v646
    %v779 = vunpack.c.l.b16 %v647
    %v780 = vunpack.c.l.b16 %v648
    %v781 = vunpack.c.l.b16 %v649
    %v782 = vunpack.c.l.b16 %v650
    %v783 = vunpack.c.l.b16 %v651
    %v784 = vunpack.c.l.b16 %v652
    %v785 = vunpack.c.l.b16 %v653
    %v786 = vunpack.c.l.b16 %v654
    %v787 = vunpack.c.l.b16 %v655
    %v788 = vunpack.c.l.b16 %v656
    %v789 = vunpack.c.l.b16 %v657
    %v790 = vunpack.c.l.b16 %v658
    %v791 = vunpack.c.l.b16 %v659
    %v792 = vunpack.c.l.b16 %v660
    %v793 = vunpack.c.l.b16 %v661
    %v794 = vunpack.c.l.b16 %v662
    %v795 = vunpack.c.l.b16 %v663
    %v796 = vunpack.c.l.b16 %v664
    %v797 = vunpack.c.l.b16 %v665
    %v798 = vunpack.c.l.b16 %v666
    %v799 = vunpack.c.l.b16 %v667
    %v800 = vunpack.c.l.b16 %v668
    %v801 = vunpack.c.l.b16 %v669
    %v802 = vunpack.c.l.b16 %v670
    %v803 = vunpack.c.l.b16 %v671
    %v804 = vunpack.c.l.b16 %v672
    %v805 = vunpack.c.l.b16 %v673
    %v806 = vunpack.c.l.b16 %v674
    %v807 = vunpack.c.l.b16 %v675
    %v808 = vunpack.c.l.b16 %v676
    %v809 = vunpack.c.l.b16 %v677
    %v810 = vunpack.c.l.b16 %v678
    %v811 = vunpack.c.l.b16 %v679
    %v812 = vunpack.c.l.b16 %v680
    %v813 = vunpack.c.l.b16 %v681
    %v814 = vunpack.c.l.b16 %v682
    %v815 = vunpack.c.l.b16 %v683
    %v816 = vunpack.c.l.b16 %v684
    %v817 = vunpack.c.l.b16 %v685
    %v818 = vunpack.c.l.b16 %v686
    %v819 = vunpack.c.l.b16 %v687
    %v820 = vunpack.c.l.b16 %v688
    %v821 = vunpack.c.l.b16 %v689
    %v822 = vunpack.c.l.b16 %v690
    %v823 = vunpack.c.l.b16 %v691
    %v824 = vunpack.c.l.b16 %v692
    %v825 = vunpack.c.l.b16 %v693
    %v826 = vunpack.c.l.b16 %v694
    %v827 = vunpack.c.l.b16 %v695
    %v828 = vunpack.c.l.b16 %v696
    %v829 = vunpack.c.l.b16 %v697
    %v830 = vunpack.c.l.b16 %v698
    %v831 = vunpack.c.l.b16 %v699
    %v832 = vunpack.c.l.b16 %v700
    %v833 = vunpack.c.l.b16 %v701
    %v834 = vunpack.c.l.b16 %v702
    %v835 = vunpack.c.l.b16 %v703
    %v836 = vunpack.c.l.b16 %v704
    %v837 = vunpack.c.l.b16 %v705
    %v838 = vunpack.c.l.b16 %v706
    %v839 = vunpack.c.l.b16 %v707
    %v840 = vunpack.c.l.b16 %v708
    %v841 = vunpack.c.l.b16 %v709
    %v842 = vpack.c.b16 %v779, %v778
    %v843 = vpack.c.b16 %v781, %v780
    %v844 = vpack.c.b16 %v783, %v782
    %v845 = vpack.c.b16 %v785, %v784
    %v846 = vpack.c.b16 %v787, %v786
    %v847 = vpack.c.b16 %v789, %v788
    %v848 = vpack.c.b16 %v791, %v790
    %v849 = vpack.c.b16 %v793, %v792
    %v850 = vpack.c.b16 %v795, %v794
    %v851 = vpack.c.b16 %v797, %v796
    %v852 = vpack.c.b16 %v799, %v798
    %v853 = vpack.c.b16 %v801, %v800
    %v854 = vpack.c.b16 %v803, %v802
    %v855 = vpack.c.b16 %v805, %v804
    %v856 = vpack.c.b16 %v807, %v806
    %v857 = vpack.c.b16 %v809, %v808
    %v858 = vpack.c.b16 %v811, %v810
    %v859 = vpack.c.b16 %v813, %v812
    %v860 = vpack.c.b16 %v815, %v814
    %v861 = vpack.c.b16 %v817, %v816
    %v862 = vpack.c.b16 %v819, %v818
    %v863 = vpack.c.b16 %v821, %v820
    %v864 = vpack.c.b16 %v823, %v822
    %v865 = vpack.c.b16 %v825, %v824
    %v866 = vpack.c.b16 %v827, %v826
    %v867 = vpack.c.b16 %v829, %v828
    %v868 = vpack.c.b16 %v831, %v830
    %v869 = vpack.c.b16 %v833, %v832
    %v870 = vpack.c.b16 %v835, %v834
    %v871 = vpack.c.b16 %v837, %v836
    %v872 = vpack.c.b16 %v839, %v838
    %v873 = vpack.c.b16 %v841, %v840
    %906 = vmatpush.bf16.msra.mxu0 %v849
    %907 = vmatpush.bf16.msra.mxu0 %v848
    %908 = vmatpush.bf16.msra.mxu0 %v847
    %909 = vmatpush.bf16.msra.mxu0 %v846
    %910 = vmatpush.bf16.msra.mxu0 %v845
    %911 = vmatpush.bf16.msra.mxu0 %v844
    %912 = vmatpush.bf16.msra.mxu0 %v843
    %913 = vmatpush.bf16.msra.mxu0 %v842
    %914 = vmatmul.bf16.gmra.mxu0 %v630
    %v915 = vpop.f32.mrf.mxu0
    %v916 = vadd.f32 %v712, %v915
    %v917 = vpop.f32.mrf.mxu0
    %v918 = vadd.f32 %v712, %v917
    %919 = vmatmul.bf16.gmra.mxu0 %v634
    %v920 = vpop.f32.mrf.mxu0
    %v921 = vadd.f32 %v712, %v920
    %v922 = vpop.f32.mrf.mxu0
    %v923 = vadd.f32 %v712, %v922
    %924 = vmatmul.bf16.gmra.mxu0 %v638
    %v925 = vpop.f32.mrf.mxu0
    %v926 = vadd.f32 %v712, %v925
    %v927 = vpop.f32.mrf.mxu0
    %v928 = vadd.f32 %v712, %v927
    %929 = vmatmul.bf16.gmra.mxu0 %v642
    %v930 = vpop.f32.mrf.mxu0
    %v931 = vadd.f32 %v712, %v930
    %v932 = vpop.f32.mrf.mxu0
    %v933 = vadd.f32 %v712, %v932
    %934 = vdwg.mxu0
    %935 = vmatpush.bf16.msra.mxu0 %v857
    %936 = vmatpush.bf16.msra.mxu0 %v856
    %937 = vmatpush.bf16.msra.mxu0 %v855
    %938 = vmatpush.bf16.msra.mxu0 %v854
    %939 = vmatpush.bf16.msra.mxu0 %v853
    %940 = vmatpush.bf16.msra.mxu0 %v852
    %941 = vmatpush.bf16.msra.mxu0 %v851
    %942 = vmatpush.bf16.msra.mxu0 %v850
    %943 = vmatmul.bf16.gmra.mxu0 %v631
    %v944 = vpop.f32.mrf.mxu0
    %v945 = vadd.f32 %v916, %v944
    %v946 = vpop.f32.mrf.mxu0
    %v947 = vadd.f32 %v918, %v946
    %948 = vmatmul.bf16.gmra.mxu0 %v635
    %v949 = vpop.f32.mrf.mxu0
    %v950 = vadd.f32 %v921, %v949
    %v951 = vpop.f32.mrf.mxu0
    %v952 = vadd.f32 %v923, %v951
    %953 = vmatmul.bf16.gmra.mxu0 %v639
    %v954 = vpop.f32.mrf.mxu0
    %v955 = vadd.f32 %v926, %v954
    %v956 = vpop.f32.mrf.mxu0
    %v957 = vadd.f32 %v928, %v956
    %958 = vmatmul.bf16.gmra.mxu0 %v643
    %v959 = vpop.f32.mrf.mxu0
    %v960 = vadd.f32 %v931, %v959
    %v961 = vpop.f32.mrf.mxu0
    %v962 = vadd.f32 %v933, %v961
    %963 = vdwg.mxu0
    %964 = vmatpush.bf16.msra.mxu0 %v865
    %965 = vmatpush.bf16.msra.mxu0 %v864
    %966 = vmatpush.bf16.msra.mxu0 %v863
    %967 = vmatpush.bf16.msra.mxu0 %v862
    %968 = vmatpush.bf16.msra.mxu0 %v861
    %969 = vmatpush.bf16.msra.mxu0 %v860
    %970 = vmatpush.bf16.msra.mxu0 %v859
    %971 = vmatpush.bf16.msra.mxu0 %v858
    %972 = vmatmul.bf16.gmra.mxu0 %v632
    %v973 = vpop.f32.mrf.mxu0
    %v974 = vadd.f32 %v945, %v973
    %v975 = vpop.f32.mrf.mxu0
    %v976 = vadd.f32 %v947, %v975
    %977 = vmatmul.bf16.gmra.mxu0 %v636
    %v978 = vpop.f32.mrf.mxu0
    %v979 = vadd.f32 %v950, %v978
    %v980 = vpop.f32.mrf.mxu0
    %v981 = vadd.f32 %v952, %v980
    %982 = vmatmul.bf16.gmra.mxu0 %v640
    %v983 = vpop.f32.mrf.mxu0
    %v984 = vadd.f32 %v955, %v983
    %v985 = vpop.f32.mrf.mxu0
    %v986 = vadd.f32 %v957, %v985
    %987 = vmatmul.bf16.gmra.mxu0 %v644
    %v988 = vpop.f32.mrf.mxu0
    %v989 = vadd.f32 %v960, %v988
    %v990 = vpop.f32.mrf.mxu0
    %v991 = vadd.f32 %v962, %v990
    %992 = vdwg.mxu0
    %993 = vmatpush.bf16.msra.mxu0 %v873
    %994 = vmatpush.bf16.msra.mxu0 %v872
    %995 = vmatpush.bf16.msra.mxu0 %v871
    %996 = vmatpush.bf16.msra.mxu0 %v870
    %997 = vmatpush.bf16.msra.mxu0 %v869
    %998 = vmatpush.bf16.msra.mxu0 %v868
    %999 = vmatpush.bf16.msra.mxu0 %v867
    %1000 = vmatpush.bf16.msra.mxu0 %v866
    %1001 = vmatmul.bf16.gmra.mxu0 %v633
    %v1002 = vpop.f32.mrf.mxu0
    %v1003 = vadd.f32 %v974, %v1002
    %v1004 = vpop.f32.mrf.mxu0
    %v1005 = vadd.f32 %v976, %v1004
    %1006 = vmatmul.bf16.gmra.mxu0 %v637
    %v1007 = vpop.f32.mrf.mxu0
    %v1008 = vadd.f32 %v979, %v1007
    %v1009 = vpop.f32.mrf.mxu0
    %v1010 = vadd.f32 %v981, %v1009
    %1011 = vmatmul.bf16.gmra.mxu0 %v641
    %v1012 = vpop.f32.mrf.mxu0
    %v1013 = vadd.f32 %v984, %v1012
    %v1014 = vpop.f32.mrf.mxu0
    %v1015 = vadd.f32 %v986, %v1014
    %1016 = vmatmul.bf16.gmra.mxu0 %v645
    %v1017 = vpop.f32.mrf.mxu0
    %v1018 = vadd.f32 %v989, %v1017
    %v1019 = vpop.f32.mrf.mxu0
    %v1020 = vadd.f32 %v991, %v1019
    %1021 = vdwg.mxu0
    %v1022 = vmax.f32 %v1003, 0.0
    %v1023 = vmax.f32 %v1005, 0.0
    %v1024 = vmax.f32 %v1008, 0.0
    %v1025 = vmax.f32 %v1010, 0.0
    %v1026 = vmax.f32 %v1013, 0.0
    %v1027 = vmax.f32 %v1015, 0.0
    %v1028 = vmax.f32 %v1018, 0.0
    %v1029 = vmax.f32 %v1020, 0.0
    %v1030 = vpack.c.bf16 %v1023, %v1022
    %v1031 = vpack.c.bf16 %v1025, %v1024
    %v1032 = vpack.c.bf16 %v1027, %v1026
    %v1033 = vpack.c.bf16 %v1029, %v1028
    %v1034 = vld [vmem:[#allocation11] sm:$0xf]
    %v1035 = vld [vmem:[#allocation11 + $0x4] sm:$0xf]
    %v1036 = vld [vmem:[#allocation11 + $0x8] sm:$0xf]
    %v1037 = vld [vmem:[#allocation11 + $0xc] sm:$0xf]
    %v1038 = vld [vmem:[#allocation11 + $0x10] sm:$0xf]
    %v1039 = vld [vmem:[#allocation11 + $0x14] sm:$0xf]
    %v1040 = vld [vmem:[#allocation11 + $0x18] sm:$0xf]
    %v1041 = vld [vmem:[#allocation11 + $0x1c] sm:$0xf]
    %v1042 = vld [vmem:[#allocation11 + $0x20] sm:$0xf]
    %v1043 = vld [vmem:[#allocation11 + $0x24] sm:$0xf]
    %v1044 = vld [vmem:[#allocation11 + $0x28] sm:$0xf]
    %v1045 = vld [vmem:[#allocation11 + $0x2c] sm:$0xf]
    %v1046 = vld [vmem:[#allocation11 + $0x30] sm:$0xf]
    %v1047 = vld [vmem:[#allocation11 + $0x34] sm:$0xf]
    %v1048 = vld [vmem:[#allocation11 + $0x38] sm:$0xf]
    %v1049 = vld [vmem:[#allocation11 + $0x3c] sm:$0xf]
    %v1050 = vld [vmem:[#allocation14 + $0x6] sm:$0x1]
    %v1052 = vperm.slane %v1050, 0
    %v1070 = vunpack.c.l.b16 %v1034
    %v1071 = vunpack.c.l.b16 %v1035
    %v1072 = vunpack.c.l.b16 %v1036
    %v1073 = vunpack.c.l.b16 %v1037
    %v1074 = vunpack.c.l.b16 %v1038
    %v1075 = vunpack.c.l.b16 %v1039
    %v1076 = vunpack.c.l.b16 %v1040
    %v1077 = vunpack.c.l.b16 %v1041
    %v1078 = vunpack.c.l.b16 %v1042
    %v1079 = vunpack.c.l.b16 %v1043
    %v1080 = vunpack.c.l.b16 %v1044
    %v1081 = vunpack.c.l.b16 %v1045
    %v1082 = vunpack.c.l.b16 %v1046
    %v1083 = vunpack.c.l.b16 %v1047
    %v1084 = vunpack.c.l.b16 %v1048
    %v1085 = vunpack.c.l.b16 %v1049
    %v1086 = vpack.c.b16 %v1071, %v1070
    %v1087 = vpack.c.b16 %v1073, %v1072
    %v1088 = vpack.c.b16 %v1075, %v1074
    %v1089 = vpack.c.b16 %v1077, %v1076
    %v1090 = vpack.c.b16 %v1079, %v1078
    %v1091 = vpack.c.b16 %v1081, %v1080
    %v1092 = vpack.c.b16 %v1083, %v1082
    %v1093 = vpack.c.b16 %v1085, %v1084
    %1102 = vmatpush.bf16.msra.mxu0 %v1093
    %1103 = vmatpush.bf16.msra.mxu0 %v1092
    %1104 = vmatpush.bf16.msra.mxu0 %v1091
    %1105 = vmatpush.bf16.msra.mxu0 %v1090
    %1106 = vmatpush.bf16.msra.mxu0 %v1089
    %1107 = vmatpush.bf16.msra.mxu0 %v1088
    %1108 = vmatpush.bf16.msra.mxu0 %v1087
    %1109 = vmatpush.bf16.msra.mxu0 %v1086
    %1110 = vmatmul.bf16.gmra.mxu0 %v1030
    %v1111 = vpop.f32.mrf.mxu0
    %v1112 = vadd.f32 %v1052, %v1111
    %v1113 = vpop.f32.mrf.mxu0
    %v1114 = vadd.f32 %v1052, %v1113
    %1115 = vmatmul.bf16.gmra.mxu0 %v1031
    %v1116 = vpop.f32.mrf.mxu0
    %v1117 = vadd.f32 %v1052, %v1116
    %v1118 = vpop.f32.mrf.mxu0
    %v1119 = vadd.f32 %v1052, %v1118
    %1120 = vmatmul.bf16.gmra.mxu0 %v1032
    %v1121 = vpop.f32.mrf.mxu0
    %v1122 = vadd.f32 %v1052, %v1121
    %v1123 = vpop.f32.mrf.mxu0
    %v1124 = vadd.f32 %v1052, %v1123
    %1125 = vmatmul.bf16.gmra.mxu0 %v1033
    %v1126 = vpop.f32.mrf.mxu0
    %v1127 = vadd.f32 %v1052, %v1126
    %v1128 = vpop.f32.mrf.mxu0
    %v1129 = vadd.f32 %v1052, %v1128
    %1130 = vdwg.mxu0
    %v1131 = vmax.f32 %v1112, 0.0
    %v1132 = vmax.f32 %v1114, 0.0
    %v1133 = vmax.f32 %v1117, 0.0
    %v1134 = vmax.f32 %v1119, 0.0
    %v1135 = vmax.f32 %v1122, 0.0
    %v1136 = vmax.f32 %v1124, 0.0
    %v1137 = vmax.f32 %v1127, 0.0
    %v1138 = vmax.f32 %v1129, 0.0
    %v1139 = vpack.c.bf16 %v1132, %v1131
    %v1140 = vpack.c.bf16 %v1134, %v1133
    %v1141 = vpack.c.bf16 %v1136, %v1135
    %v1142 = vpack.c.bf16 %v1138, %v1137
    %v1143 = vld [vmem:[#allocation12] sm:$0xf]
    %v1144 = vld [vmem:[#allocation12 + $0x4] sm:$0xf]
    %v1145 = vld [vmem:[#allocation12 + $0x8] sm:$0xf]
    %v1146 = vld [vmem:[#allocation12 + $0xc] sm:$0xf]
    %v1147 = vld [vmem:[#allocation12 + $0x10] sm:$0xf]
    %v1148 = vld [vmem:[#allocation12 + $0x14] sm:$0xf]
    %v1149 = vld [vmem:[#allocation12 + $0x18] sm:$0xf]
    %v1150 = vld [vmem:[#allocation12 + $0x1c] sm:$0xf]
    %v1151 = vld [vmem:[#allocation12 + $0x20] sm:$0xf]
    %v1152 = vld [vmem:[#allocation12 + $0x24] sm:$0xf]
    %v1153 = vld [vmem:[#allocation12 + $0x28] sm:$0xf]
    %v1154 = vld [vmem:[#allocation12 + $0x2c] sm:$0xf]
    %v1155 = vld [vmem:[#allocation12 + $0x30] sm:$0xf]
    %v1156 = vld [vmem:[#allocation12 + $0x34] sm:$0xf]
    %v1157 = vld [vmem:[#allocation12 + $0x38] sm:$0xf]
    %v1158 = vld [vmem:[#allocation12 + $0x3c] sm:$0xf]
    %v1159 = vld [vmem:[#allocation14 + $0x7] sm:$0x1]
    %v1161 = vperm.slane %v1159, 0
    %v1179 = vunpack.c.l.b16 %v1143
    %v1180 = vunpack.c.l.b16 %v1144
    %v1181 = vunpack.c.l.b16 %v1145
    %v1182 = vunpack.c.l.b16 %v1146
    %v1183 = vunpack.c.l.b16 %v1147
    %v1184 = vunpack.c.l.b16 %v1148
    %v1185 = vunpack.c.l.b16 %v1149
    %v1186 = vunpack.c.l.b16 %v1150
    %v1187 = vunpack.c.l.b16 %v1151
    %v1188 = vunpack.c.l.b16 %v1152
    %v1189 = vunpack.c.l.b16 %v1153
    %v1190 = vunpack.c.l.b16 %v1154
    %v1191 = vunpack.c.l.b16 %v1155
    %v1192 = vunpack.c.l.b16 %v1156
    %v1193 = vunpack.c.l.b16 %v1157
    %v1194 = vunpack.c.l.b16 %v1158
    %v1195 = vpack.c.b16 %v1180, %v1179
    %v1196 = vpack.c.b16 %v1182, %v1181
    %v1197 = vpack.c.b16 %v1184, %v1183
    %v1198 = vpack.c.b16 %v1186, %v1185
    %v1199 = vpack.c.b16 %v1188, %v1187
    %v1200 = vpack.c.b16 %v1190, %v1189
    %v1201 = vpack.c.b16 %v1192, %v1191
    %v1202 = vpack.c.b16 %v1194, %v1193
    %1211 = vmatpush.bf16.msra.mxu0 %v1202
    %1212 = vmatpush.bf16.msra.mxu0 %v1201
    %1213 = vmatpush.bf16.msra.mxu0 %v1200
    %1214 = vmatpush.bf16.msra.mxu0 %v1199
    %1215 = vmatpush.bf16.msra.mxu0 %v1198
    %1216 = vmatpush.bf16.msra.mxu0 %v1197
    %1217 = vmatpush.bf16.msra.mxu0 %v1196
    %1218 = vmatpush.bf16.msra.mxu0 %v1195
    %1219 = vmatmul.bf16.gmra.mxu0 %v1139
    %v1220 = vpop.f32.mrf.mxu0
    %v1221 = vadd.f32 %v1161, %v1220
    %v1222 = vpop.f32.mrf.mxu0
    %v1223 = vadd.f32 %v1161, %v1222
    %1224 = vmatmul.bf16.gmra.mxu0 %v1140
    %v1225 = vpop.f32.mrf.mxu0
    %v1226 = vadd.f32 %v1161, %v1225
    %v1227 = vpop.f32.mrf.mxu0
    %v1228 = vadd.f32 %v1161, %v1227
    %1229 = vmatmul.bf16.gmra.mxu0 %v1141
    %v1230 = vpop.f32.mrf.mxu0
    %v1231 = vadd.f32 %v1161, %v1230
    %v1232 = vpop.f32.mrf.mxu0
    %v1233 = vadd.f32 %v1161, %v1232
    %1234 = vmatmul.bf16.gmra.mxu0 %v1142
    %v1235 = vpop.f32.mrf.mxu0
    %v1236 = vadd.f32 %v1161, %v1235
    %v1237 = vpop.f32.mrf.mxu0
    %v1238 = vadd.f32 %v1161, %v1237
    %1239 = vdwg.mxu0
    %v1240 = vtanh.pop %v1221
    %v1241 = vtanh.pop %v1223
    %v1242 = vtanh.pop %v1226
    %v1243 = vtanh.pop %v1228
    %v1244 = vtanh.pop %v1231
    %v1245 = vtanh.pop %v1233
    %v1246 = vtanh.pop %v1236
    %v1247 = vtanh.pop %v1238
    %v1248 = vstv %s138
    %v1249 = vmul.f32 %v1240, %v1248
    %v1250 = vmul.f32 %v1241, %v1248
    %v1251 = vmul.f32 %v1242, %v1248
    %v1252 = vmul.f32 %v1243, %v1248
    %v1253 = vmul.f32 %v1244, %v1248
    %v1254 = vmul.f32 %v1245, %v1248
    %v1255 = vmul.f32 %v1246, %v1248
    %v1256 = vmul.f32 %v1247, %v1248
    %1257 = vst [vmem:[#allocation15] sm:$0xff] %v1249
    %1258 = vst [vmem:[#allocation15 + $0x8] sm:$0xff] %v1250
    %1259 = vst [vmem:[#allocation15 + $0x10] sm:$0xff] %v1251
    %1260 = vst [vmem:[#allocation15 + $0x18] sm:$0xff] %v1252
    %1261 = vst [vmem:[#allocation15 + $0x20] sm:$0xff] %v1253
    %1262 = vst [vmem:[#allocation15 + $0x28] sm:$0xff] %v1254
    %1263 = vst [vmem:[#allocation15 + $0x30] sm:$0xff] %v1255
    %1264 = vst [vmem:[#allocation15 + $0x38] sm:$0xff] %v1256
    // Predicated region
    $region62: #{tpu_custom_call.1} parent=1 // pred_check
      _
    $region63: #{tpu_custom_call.1} parent=1 // pred_check_branch
      %1266 = sbr.rel (0) target = $region65
    $region64: #{tpu_custom_call.1} parent=1 // pred_region
      %1268 = vsyncadd [#allocation5], 0
      %s1269 = sshll.u32 [#allocation15], 4
      %s1270 = int_to_ptr.vmem [resolvable:$true] %s1269
      %s1271 = sshll.u32 %s8, 4
      %s1272 = int_to_ptr.hbm [resolvable:$true] %s1271
      %1277 = dma.vmem_to_hbm [thread:$0]  %s1270, 1024, %s1272, [#allocation5], 128, 128, 8
    $region65: #{tpu_custom_call.1} parent=1 // pred_fallthru
      _
    // Predicated region
    $region66: #{tpu_custom_call.1} parent=1 // pred_check
      _
    $region67: #{tpu_custom_call.1} parent=1 // pred_check_branch
      %1279 = sbr.rel (0) target = $region69
    $region68: #{tpu_custom_call.1} parent=1 // pred_region
      %1281 = dma.done [#allocation5], 1024
    $region69: #{tpu_custom_call.1} parent=1 // pred_fallthru
      _
    %1282 = vsyncpa [#allocation4], 1
    %1283 = vsyncpa [#allocation7], 1
    %1284 = vsyncpa [#allocation10], 1
    %1285 = vsyncpa [#allocation13], 1
    %1286 = vsyncpa [#allocation5], 1

// kernel: tpu_custom_call.1
$region0: #{tpu_custom_call.1}
  #allocation0 [shape = 'u32[]', space=smem, size = 0x4, offset = 0x4, fixed_abs, tag = 'smem constant byte address 0x4 - core index']
  #allocation1 [shape = 'u32[72,128]{1,0:T(1,128)}', space=vmem, size = 0x9000, scoped, tag = 'internal scratch']
  #allocation2 [shape = 'f32[1]{0:T(128)S(6)}', space=smem, size = 0x200, scoped, tag = 'scoped memory for tpu_custom_call.1']
  %s0 = inlined_call_operand.hbm [shape: bf16[64,128], index: 0, kind: input, shape index: {}]
  %s1 = inlined_call_operand.hbm [shape: bf16[128,128], index: 1, kind: input, shape index: {}]
  %s2 = inlined_call_operand.hbm [shape: bf16[128,512], index: 2, kind: input, shape index: {}]
  %s3 = inlined_call_operand.hbm [shape: bf16[512,128], index: 3, kind: input, shape index: {}]
  %s4 = inlined_call_operand.hbm [shape: bf16[128,128], index: 4, kind: input, shape index: {}]
  %s5 = inlined_call_operand.hbm [shape: bf16[128,128], index: 5, kind: input, shape index: {}]
  %s6 = inlined_call_operand.hbm [shape: f32[1,1024], index: 6, kind: input, shape index: {}]
  %s7 = inlined_call_operand.<no memory space> [shape: f32[1], index: 7, kind: input, shape index: {}]
  %s8 = inlined_call_operand.hbm [shape: f32[64,128], index: 8, kind: output, shape index: {}]
  %s9 = sld [smem:[#allocation0]]
  $region70: #{tpu_custom_call.1} parent=0
    _
  %s11 = ssub.s32 1, %s9
  %s12 = scalar_select 0, %s11, %s9
  %13 = sst [smem:[#allocation2]] %s7
  $region1: #{tpu_custom_call.1} parent=0
    #allocation3 [shape = 'u8[16384]{0}', space=vmem, size = 0x4000, scoped, tag = 'input window, operand 0, single buffered']
    #allocation4 [shape = 's32[1]{0}', space=sflag, size = 0x4, scoped, tag = 'scoped memory for tpu_custom_call.1']
    #allocation5 [shape = 's32[1]{0}', space=sflag, size = 0x4, scoped, tag = 'scoped memory for tpu_custom_call.1']
    #allocation6 [shape = 'u8[32768]{0}', space=vmem, size = 0x8000, scoped, tag = 'input window, operand 1, single buffered']
    #allocation7 [shape = 's32[1]{0}', space=sflag, size = 0x4, scoped, tag = 'scoped memory for tpu_custom_call.1']
    #allocation8 [shape = 'u8[131072]{0}', space=vmem, size = 0x20000, scoped, tag = 'input window, operand 2, single buffered']
    #allocation9 [shape = 'u8[131072]{0}', space=vmem, size = 0x20000, scoped, tag = 'input window, operand 3, single buffered']
    #allocation10 [shape = 's32[1]{0}', space=sflag, size = 0x4, scoped, tag = 'scoped memory for tpu_custom_call.1']
    #allocation11 [shape = 'u8[32768]{0}', space=vmem, size = 0x8000, scoped, tag = 'input window, operand 4, single buffered']
    #allocation12 [shape = 'u8[32768]{0}', space=vmem, size = 0x8000, scoped, tag = 'input window, operand 5, single buffered']
    #allocation13 [shape = 's32[1]{0}', space=sflag, size = 0x4, scoped, tag = 'scoped memory for tpu_custom_call.1']
    #allocation14 [shape = 'u8[4096]{0}', space=vmem, size = 0x1000, scoped, tag = 'input window, operand 6, single buffered']
    #allocation15 [shape = 'u8[32768]{0}', space=vmem, size = 0x8000, scoped, tag = 'output window, operand 0, single buffered']
    %14 = vsyncpa [#allocation4], 0
    %15 = vsyncpa [#allocation7], 0
    %16 = vsyncpa [#allocation10], 0
    %17 = vsyncpa [#allocation13], 0
    %18 = vsyncpa [#allocation5], 0
    // Predicated region
    $region2: #{tpu_custom_call.1} parent=1 // pred_check
      _
    $region3: #{tpu_custom_call.1} parent=1 // pred_check_branch
      %20 = sbr.rel (0) target = $region5
    $region4: #{tpu_custom_call.1} parent=1 // pred_region
      %22 = vsyncadd [#allocation4], 0
      %s23 = sshll.u32 %s0, 4
      %s24 = int_to_ptr.hbm [resolvable:$true] %s23
      %s25 = sshll.u32 [#allocation3], 4
      %s26 = int_to_ptr.vmem [resolvable:$true] %s25
      %31 = dma.hbm_to_vmem [thread:$0]  %s24, 512, %s26, [#allocation4], 64, 64, 4
    $region5: #{tpu_custom_call.1} parent=1 // pred_fallthru
      _
    // Predicated region
    $region6: #{tpu_custom_call.1} parent=1 // pred_check
      _
    $region7: #{tpu_custom_call.1} parent=1 // pred_check_branch
      %33 = sbr.rel (0) target = $region9
    $region8: #{tpu_custom_call.1} parent=1 // pred_region
      %35 = vsyncadd [#allocation7], 0
      %s36 = sshll.u32 %s1, 4
      %s37 = int_to_ptr.hbm [resolvable:$true] %s36
      %s38 = sshll.u32 [#allocation6], 4
      %s39 = int_to_ptr.vmem [resolvable:$true] %s38
      %44 = dma.hbm_to_vmem [thread:$0]  %s37, 1024, %s39, [#allocation7], 64, 64, 4
    $region9: #{tpu_custom_call.1} parent=1 // pred_fallthru
      _
    // Predicated region
    $region10: #{tpu_custom_call.1} parent=1 // pred_check
      _
    $region11: #{tpu_custom_call.1} parent=1 // pred_check_branch
      %46 = sbr.rel (0) target = $region13
    $region12: #{tpu_custom_call.1} parent=1 // pred_region
      %48 = vsyncadd [#allocation7], 0
      %s49 = sshll.u32 %s2, 4
      %s50 = int_to_ptr.hbm [resolvable:$true] %s49
      %s51 = sshll.u32 [#allocation8], 4
      %s52 = int_to_ptr.vmem [resolvable:$true] %s51
      %57 = dma.hbm_to_vmem [thread:$0]  %s50, 4096, %s52, [#allocation7], 256, 256, 16
    $region13: #{tpu_custom_call.1} parent=1 // pred_fallthru
      _
    // Predicated region
    $region14: #{tpu_custom_call.1} parent=1 // pred_check
      _
    $region15: #{tpu_custom_call.1} parent=1 // pred_check_branch
      %59 = sbr.rel (0) target = $region17
    $region16: #{tpu_custom_call.1} parent=1 // pred_region
      %61 = vsyncadd [#allocation10], 0
      %s62 = sshll.u32 %s3, 4
      %s63 = int_to_ptr.hbm [resolvable:$true] %s62
      %s64 = sshll.u32 [#allocation9], 4
      %s65 = int_to_ptr.vmem [resolvable:$true] %s64
      %70 = dma.hbm_to_vmem [thread:$0]  %s63, 4096, %s65, [#allocation10], 64, 64, 4
    $region17: #{tpu_custom_call.1} parent=1 // pred_fallthru
      _
    // Predicated region
    $region18: #{tpu_custom_call.1} parent=1 // pred_check
      _
    $region19: #{tpu_custom_call.1} parent=1 // pred_check_branch
      %72 = sbr.rel (0) target = $region21
    $region20: #{tpu_custom_call.1} parent=1 // pred_region
      %74 = vsyncadd [#allocation10], 0
      %s75 = sshll.u32 %s4, 4
      %s76 = int_to_ptr.hbm [resolvable:$true] %s75
      %s77 = sshll.u32 [#allocation11], 4
      %s78 = int_to_ptr.vmem [resolvable:$true] %s77
      %83 = dma.hbm_to_vmem [thread:$0]  %s76, 1024, %s78, [#allocation10], 64, 64, 4
    $region21: #{tpu_custom_call.1} parent=1 // pred_fallthru
      _
    // Predicated region
    $region22: #{tpu_custom_call.1} parent=1 // pred_check
      _
    $region23: #{tpu_custom_call.1} parent=1 // pred_check_branch
      %85 = sbr.rel (0) target = $region25
    $region24: #{tpu_custom_call.1} parent=1 // pred_region
      %87 = vsyncadd [#allocation13], 0
      %s88 = sshll.u32 %s5, 4
      %s89 = int_to_ptr.hbm [resolvable:$true] %s88
      %s90 = sshll.u32 [#allocation12], 4
      %s91 = int_to_ptr.vmem [resolvable:$true] %s90
      %96 = dma.hbm_to_vmem [thread:$0]  %s89, 1024, %s91, [#allocation13], 64, 64, 4
    $region25: #{tpu_custom_call.1} parent=1 // pred_fallthru
      _
    // Predicated region
    $region26: #{tpu_custom_call.1} parent=1 // pred_check
      _
    $region27: #{tpu_custom_call.1} parent=1 // pred_check_branch
      %98 = sbr.rel (0) target = $region29
    $region28: #{tpu_custom_call.1} parent=1 // pred_region
      %100 = vsyncadd [#allocation13], 0
      %s102 = sshll.u32 %s6, 4
      %s103 = int_to_ptr.hbm [resolvable:$true] %s102
      %s104 = sshll.u32 [#allocation14], 4
      %s105 = int_to_ptr.vmem [resolvable:$true] %s104
      %107 = dma.hbm_to_vmem [thread:$0]  %s103, 128, %s105, [#allocation13]
    $region29: #{tpu_custom_call.1} parent=1 // pred_fallthru
      _
    // Predicated region
    $region30: #{tpu_custom_call.1} parent=1 // pred_check
      _
    $region31: #{tpu_custom_call.1} parent=1 // pred_check_branch
      %109 = sbr.rel (0) target = $region33
    $region32: #{tpu_custom_call.1} parent=1 // pred_region
      _
    $region33: #{tpu_custom_call.1} parent=1 // pred_fallthru
      _
    // Predicated region
    $region34: #{tpu_custom_call.1} parent=1 // pred_check
      _
    $region35: #{tpu_custom_call.1} parent=1 // pred_check_branch
      %111 = sbr.rel (0) target = $region37
    $region36: #{tpu_custom_call.1} parent=1 // pred_region
      %113 = dma.done [#allocation4], 512
    $region37: #{tpu_custom_call.1} parent=1 // pred_fallthru
      _
    // Predicated region
    $region38: #{tpu_custom_call.1} parent=1 // pred_check
      _
    $region39: #{tpu_custom_call.1} parent=1 // pred_check_branch
      %115 = sbr.rel (0) target = $region41
    $region40: #{tpu_custom_call.1} parent=1 // pred_region
      %117 = dma.done [#allocation7], 1024
    $region41: #{tpu_custom_call.1} parent=1 // pred_fallthru
      _
    // Predicated region
    $region42: #{tpu_custom_call.1} parent=1 // pred_check
      _
    $region43: #{tpu_custom_call.1} parent=1 // pred_check_branch
      %119 = sbr.rel (0) target = $region45
    $region44: #{tpu_custom_call.1} parent=1 // pred_region
      %121 = dma.done [#allocation7], 4096
    $region45: #{tpu_custom_call.1} parent=1 // pred_fallthru
      _
    // Predicated region
    $region46: #{tpu_custom_call.1} parent=1 // pred_check
      _
    $region47: #{tpu_custom_call.1} parent=1 // pred_check_branch
      %123 = sbr.rel (0) target = $region49
    $region48: #{tpu_custom_call.1} parent=1 // pred_region
      %125 = dma.done [#allocation10], 4096
    $region49: #{tpu_custom_call.1} parent=1 // pred_fallthru
      _
    // Predicated region
    $region50: #{tpu_custom_call.1} parent=1 // pred_check
      _
    $region51: #{tpu_custom_call.1} parent=1 // pred_check_branch
      %127 = sbr.rel (0) target = $region53
    $region52: #{tpu_custom_call.1} parent=1 // pred_region
      %129 = dma.done [#allocation10], 1024
    $region53: #{tpu_custom_call.1} parent=1 // pred_fallthru
      _
    // Predicated region
    $region54: #{tpu_custom_call.1} parent=1 // pred_check
      _
    $region55: #{tpu_custom_call.1} parent=1 // pred_check_branch
      %131 = sbr.rel (0) target = $region57
    $region56: #{tpu_custom_call.1} parent=1 // pred_region
      %133 = dma.done [#allocation13], 1024
    $region57: #{tpu_custom_call.1} parent=1 // pred_fallthru
      _
    // Predicated region
    $region58: #{tpu_custom_call.1} parent=1 // pred_check
      _
    $region59: #{tpu_custom_call.1} parent=1 // pred_check_branch
      %135 = sbr.rel (0) target = $region61
    $region60: #{tpu_custom_call.1} parent=1 // pred_region
      %137 = dma.done [#allocation13], 128
    $region61: #{tpu_custom_call.1} parent=1 // pred_fallthru
      _
    %s138 = sld [smem:[#allocation2]]
    %v139 = vld [vmem:[#allocation3] sm:$0xf]
    %v140 = vld [vmem:[#allocation3 + $0x4] sm:$0xf]
    %v141 = vld [vmem:[#allocation3 + $0x8] sm:$0xf]
    %v142 = vld [vmem:[#allocation3 + $0xc] sm:$0xf]
    %v143 = vld [vmem:[#allocation3 + $0x10] sm:$0xf]
    %v144 = vld [vmem:[#allocation3 + $0x14] sm:$0xf]
    %v145 = vld [vmem:[#allocation3 + $0x18] sm:$0xf]
    %v146 = vld [vmem:[#allocation3 + $0x1c] sm:$0xf]
    %v147 = vld [vmem:[#allocation6] sm:$0xf]
    %v148 = vld [vmem:[#allocation6 + $0x4] sm:$0xf]
    %v149 = vld [vmem:[#allocation6 + $0x8] sm:$0xf]
    %v150 = vld [vmem:[#allocation6 + $0xc] sm:$0xf]
    %v151 = vld [vmem:[#allocation6 + $0x10] sm:$0xf]
    %v152 = vld [vmem:[#allocation6 + $0x14] sm:$0xf]
    %v153 = vld [vmem:[#allocation6 + $0x18] sm:$0xf]
    %v154 = vld [vmem:[#allocation6 + $0x1c] sm:$0xf]
    %v155 = vld [vmem:[#allocation6 + $0x20] sm:$0xf]
    %v156 = vld [vmem:[#allocation6 + $0x24] sm:$0xf]
    %v157 = vld [vmem:[#allocation6 + $0x28] sm:$0xf]
    %v158 = vld [vmem:[#allocation6 + $0x2c] sm:$0xf]
    %v159 = vld [vmem:[#allocation6 + $0x30] sm:$0xf]
    %v160 = vld [vmem:[#allocation6 + $0x34] sm:$0xf]
    %v161 = vld [vmem:[#allocation6 + $0x38] sm:$0xf]
    %v162 = vld [vmem:[#allocation6 + $0x3c] sm:$0xf]
    %v163 = vld [vmem:[#allocation14] sm:$0x1]
    %v165 = vperm.slane %v163, 0
    %v175 = vunpack.c.l.b16 %v139
    %v176 = vunpack.c.l.b16 %v140
    %v177 = vunpack.c.l.b16 %v141
    %v178 = vunpack.c.l.b16 %v142
    %v179 = vunpack.c.l.b16 %v143
    %v180 = vunpack.c.l.b16 %v144
    %v181 = vunpack.c.l.b16 %v145
    %v182 = vunpack.c.l.b16 %v146
    %v183 = vpack.c.b16 %v176, %v175
    %v184 = vpack.c.b16 %v178, %v177
    %v185 = vpack.c.b16 %v180, %v179
    %v186 = vpack.c.b16 %v182, %v181
    %v207 = vunpack.c.l.b16 %v147
    %v208 = vunpack.c.l.b16 %v148
    %v209 = vunpack.c.l.b16 %v149
    %v210 = vunpack.c.l.b16 %v150
    %v211 = vunpack.c.l.b16 %v151
    %v212 = vunpack.c.l.b16 %v152
    %v213 = vunpack.c.l.b16 %v153
    %v214 = vunpack.c.l.b16 %v154
    %v215 = vunpack.c.l.b16 %v155
    %v216 = vunpack.c.l.b16 %v156
    %v217 = vunpack.c.l.b16 %v157
    %v218 = vunpack.c.l.b16 %v158
    %v219 = vunpack.c.l.b16 %v159
    %v220 = vunpack.c.l.b16 %v160
    %v221 = vunpack.c.l.b16 %v161
    %v222 = vunpack.c.l.b16 %v162
    %v223 = vpack.c.b16 %v208, %v207
    %v224 = vpack.c.b16 %v210, %v209
    %v225 = vpack.c.b16 %v212, %v211
    %v226 = vpack.c.b16 %v214, %v213
    %v227 = vpack.c.b16 %v216, %v215
    %v228 = vpack.c.b16 %v218, %v217
    %v229 = vpack.c.b16 %v220, %v219
    %v230 = vpack.c.b16 %v222, %v221
    %239 = vmatpush.bf16.msra.mxu0 %v230
    %240 = vmatpush.bf16.msra.mxu0 %v229
    %241 = vmatpush.bf16.msra.mxu0 %v228
    %242 = vmatpush.bf16.msra.mxu0 %v227
    %243 = vmatpush.bf16.msra.mxu0 %v226
    %244 = vmatpush.bf16.msra.mxu0 %v225
    %245 = vmatpush.bf16.msra.mxu0 %v224
    %246 = vmatpush.bf16.msra.mxu0 %v223
    %247 = vmatmul.bf16.gmra.mxu0 %v183
    %v248 = vpop.f32.mrf.mxu0
    %v249 = vadd.f32 %v165, %v248
    %v250 = vpop.f32.mrf.mxu0
    %v251 = vadd.f32 %v165, %v250
    %252 = vmatmul.bf16.gmra.mxu0 %v184
    %v253 = vpop.f32.mrf.mxu0
    %v254 = vadd.f32 %v165, %v253
    %v255 = vpop.f32.mrf.mxu0
    %v256 = vadd.f32 %v165, %v255
    %257 = vmatmul.bf16.gmra.mxu0 %v185
    %v258 = vpop.f32.mrf.mxu0
    %v259 = vadd.f32 %v165, %v258
    %v260 = vpop.f32.mrf.mxu0
    %v261 = vadd.f32 %v165, %v260
    %262 = vmatmul.bf16.gmra.mxu0 %v186
    %v263 = vpop.f32.mrf.mxu0
    %v264 = vadd.f32 %v165, %v263
    %v265 = vpop.f32.mrf.mxu0
    %v266 = vadd.f32 %v165, %v265
    %267 = vdwg.mxu0
    %v268 = vtanh.pop %v249
    %v269 = vtanh.pop %v251
    %v270 = vtanh.pop %v254
    %v271 = vtanh.pop %v256
    %v272 = vtanh.pop %v259
    %v273 = vtanh.pop %v261
    %v274 = vtanh.pop %v264
    %v275 = vtanh.pop %v266
    %v276 = vpack.c.bf16 %v269, %v268
    %v277 = vpack.c.bf16 %v271, %v270
    %v278 = vpack.c.bf16 %v273, %v272
    %v279 = vpack.c.bf16 %v275, %v274
    %v280 = vld [vmem:[#allocation8] sm:$0xff]
    %v281 = vld [vmem:[#allocation8 + $0x8] sm:$0xff]
    %v282 = vld [vmem:[#allocation8 + $0x10] sm:$0xff]
    %v283 = vld [vmem:[#allocation8 + $0x18] sm:$0xff]
    %v284 = vld [vmem:[#allocation8 + $0x20] sm:$0xff]
    %v285 = vld [vmem:[#allocation8 + $0x28] sm:$0xff]
    %v286 = vld [vmem:[#allocation8 + $0x30] sm:$0xff]
    %v287 = vld [vmem:[#allocation8 + $0x38] sm:$0xff]
    %v288 = vld [vmem:[#allocation8 + $0x40] sm:$0xff]
    %v289 = vld [vmem:[#allocation8 + $0x48] sm:$0xff]
    %v290 = vld [vmem:[#allocation8 + $0x50] sm:$0xff]
    %v291 = vld [vmem:[#allocation8 + $0x58] sm:$0xff]
    %v292 = vld [vmem:[#allocation8 + $0x60] sm:$0xff]
    %v293 = vld [vmem:[#allocation8 + $0x68] sm:$0xff]
    %v294 = vld [vmem:[#allocation8 + $0x70] sm:$0xff]
    %v295 = vld [vmem:[#allocation8 + $0x78] sm:$0xff]
    %v296 = vld [vmem:[#allocation8 + $0x80] sm:$0xff]
    %v297 = vld [vmem:[#allocation8 + $0x88] sm:$0xff]
    %v298 = vld [vmem:[#allocation8 + $0x90] sm:$0xff]
    %v299 = vld [vmem:[#allocation8 + $0x98] sm:$0xff]
    %v300 = vld [vmem:[#allocation8 + $0xa0] sm:$0xff]
    %v301 = vld [vmem:[#allocation8 + $0xa8] sm:$0xff]
    %v302 = vld [vmem:[#allocation8 + $0xb0] sm:$0xff]
    %v303 = vld [vmem:[#allocation8 + $0xb8] sm:$0xff]
    %v304 = vld [vmem:[#allocation8 + $0xc0] sm:$0xff]
    %v305 = vld [vmem:[#allocation8 + $0xc8] sm:$0xff]
    %v306 = vld [vmem:[#allocation8 + $0xd0] sm:$0xff]
    %v307 = vld [vmem:[#allocation8 + $0xd8] sm:$0xff]
    %v308 = vld [vmem:[#allocation8 + $0xe0] sm:$0xff]
    %v309 = vld [vmem:[#allocation8 + $0xe8] sm:$0xff]
    %v310 = vld [vmem:[#allocation8 + $0xf0] sm:$0xff]
    %v311 = vld [vmem:[#allocation8 + $0xf8] sm:$0xff]
    %v312 = vld [vmem:[#allocation14 + $0x1] sm:$0xf]
    %v314 = vperm.slane %v312, 0
    %v315 = vperm.slane %v312, 1
    %v316 = vperm.slane %v312, 2
    %v317 = vperm.slane %v312, 3
    %v354 = vunpack.c.l.b16 %v280
    %v355 = vunpack.c.h.b16 %v280
    %v356 = vunpack.c.l.b16 %v281
    %v357 = vunpack.c.h.b16 %v281
    %v358 = vunpack.c.l.b16 %v282
    %v359 = vunpack.c.h.b16 %v282
    %v360 = vunpack.c.l.b16 %v283
    %v361 = vunpack.c.h.b16 %v283
    %v362 = vunpack.c.l.b16 %v284
    %v363 = vunpack.c.h.b16 %v284
    %v364 = vunpack.c.l.b16 %v285
    %v365 = vunpack.c.h.b16 %v285
    %v366 = vunpack.c.l.b16 %v286
    %v367 = vunpack.c.h.b16 %v286
    %v368 = vunpack.c.l.b16 %v287
    %v369 = vunpack.c.h.b16 %v287
    %v370 = vunpack.c.l.b16 %v288
    %v371 = vunpack.c.h.b16 %v288
    %v372 = vunpack.c.l.b16 %v289
    %v373 = vunpack.c.h.b16 %v289
    %v374 = vunpack.c.l.b16 %v290
    %v375 = vunpack.c.h.b16 %v290
    %v376 = vunpack.c.l.b16 %v291
    %v377 = vunpack.c.h.b16 %v291
    %v378 = vunpack.c.l.b16 %v292
    %v379 = vunpack.c.h.b16 %v292
    %v380 = vunpack.c.l.b16 %v293
    %v381 = vunpack.c.h.b16 %v293
    %v382 = vunpack.c.l.b16 %v294
    %v383 = vunpack.c.h.b16 %v294
    %v384 = vunpack.c.l.b16 %v295
    %v385 = vunpack.c.h.b16 %v295
    %v386 = vunpack.c.l.b16 %v296
    %v387 = vunpack.c.h.b16 %v296
    %v388 = vunpack.c.l.b16 %v297
    %v389 = vunpack.c.h.b16 %v297
    %v390 = vunpack.c.l.b16 %v298
    %v391 = vunpack.c.h.b16 %v298
    %v392 = vunpack.c.l.b16 %v299
    %v393 = vunpack.c.h.b16 %v299
    %v394 = vunpack.c.l.b16 %v300
    %v395 = vunpack.c.h.b16 %v300
    %v396 = vunpack.c.l.b16 %v301
    %v397 = vunpack.c.h.b16 %v301
    %v398 = vunpack.c.l.b16 %v302
    %v399 = vunpack.c.h.b16 %v302
    %v400 = vunpack.c.l.b16 %v303
    %v401 = vunpack.c.h.b16 %v303
    %v402 = vunpack.c.l.b16 %v304
    %v403 = vunpack.c.h.b16 %v304
    %v404 = vunpack.c.l.b16 %v305
    %v405 = vunpack.c.h.b16 %v305
    %v406 = vunpack.c.l.b16 %v306
    %v407 = vunpack.c.h.b16 %v306
    %v408 = vunpack.c.l.b16 %v307
    %v409 = vunpack.c.h.b16 %v307
    %v410 = vunpack.c.l.b16 %v308
    %v411 = vunpack.c.h.b16 %v308
    %v412 = vunpack.c.l.b16 %v309
    %v413 = vunpack.c.h.b16 %v309
    %v414 = vunpack.c.l.b16 %v310
    %v415 = vunpack.c.h.b16 %v310
    %v416 = vunpack.c.l.b16 %v311
    %v417 = vunpack.c.h.b16 %v311
    %v418 = vpack.c.b16 %v358, %v354
    %v419 = vpack.c.b16 %v359, %v355
    %v420 = vpack.c.b16 %v360, %v356
    %v421 = vpack.c.b16 %v361, %v357
    %v422 = vpack.c.b16 %v366, %v362
    %v423 = vpack.c.b16 %v367, %v363
    %v424 = vpack.c.b16 %v368, %v364
    %v425 = vpack.c.b16 %v369, %v365
    %v426 = vpack.c.b16 %v374, %v370
    %v427 = vpack.c.b16 %v375, %v371
    %v428 = vpack.c.b16 %v376, %v372
    %v429 = vpack.c.b16 %v377, %v373
    %v430 = vpack.c.b16 %v382, %v378
    %v431 = vpack.c.b16 %v383, %v379
    %v432 = vpack.c.b16 %v384, %v380
    %v433 = vpack.c.b16 %v385, %v381
    %v434 = vpack.c.b16 %v390, %v386
    %v435 = vpack.c.b16 %v391, %v387
    %v436 = vpack.c.b16 %v392, %v388
    %v437 = vpack.c.b16 %v393, %v389
    %v438 = vpack.c.b16 %v398, %v394
    %v439 = vpack.c.b16 %v399, %v395
    %v440 = vpack.c.b16 %v400, %v396
    %v441 = vpack.c.b16 %v401, %v397
    %v442 = vpack.c.b16 %v406, %v402
    %v443 = vpack.c.b16 %v407, %v403
    %v444 = vpack.c.b16 %v408, %v404
    %v445 = vpack.c.b16 %v409, %v405
    %v446 = vpack.c.b16 %v414, %v410
    %v447 = vpack.c.b16 %v415, %v411
    %v448 = vpack.c.b16 %v416, %v412
    %v449 = vpack.c.b16 %v417, %v413
    %482 = vmatpush.bf16.msra.mxu0 %v446
    %483 = vmatpush.bf16.msra.mxu0 %v442
    %484 = vmatpush.bf16.msra.mxu0 %v438
    %485 = vmatpush.bf16.msra.mxu0 %v434
    %486 = vmatpush.bf16.msra.mxu0 %v430
    %487 = vmatpush.bf16.msra.mxu0 %v426
    %488 = vmatpush.bf16.msra.mxu0 %v422
    %489 = vmatpush.bf16.msra.mxu0 %v418
    %490 = vmatmul.bf16.gmra.mxu0 %v276
    %v491 = vpop.f32.mrf.mxu0
    %v492 = vadd.f32 %v314, %v491
    %v493 = vpop.f32.mrf.mxu0
    %v494 = vadd.f32 %v314, %v493
    %495 = vmatmul.bf16.gmra.mxu0 %v277
    %v496 = vpop.f32.mrf.mxu0
    %v497 = vadd.f32 %v314, %v496
    %v498 = vpop.f32.mrf.mxu0
    %v499 = vadd.f32 %v314, %v498
    %500 = vmatmul.bf16.gmra.mxu0 %v278
    %v501 = vpop.f32.mrf.mxu0
    %v502 = vadd.f32 %v314, %v501
    %v503 = vpop.f32.mrf.mxu0
    %v504 = vadd.f32 %v314, %v503
    %505 = vmatmul.bf16.gmra.mxu0 %v279
    %v506 = vpop.f32.mrf.mxu0
    %v507 = vadd.f32 %v314, %v506
    %v508 = vpop.f32.mrf.mxu0
    %v509 = vadd.f32 %v314, %v508
    %510 = vdwg.mxu0
    %511 = vmatpush.bf16.msra.mxu0 %v447
    %512 = vmatpush.bf16.msra.mxu0 %v443
    %513 = vmatpush.bf16.msra.mxu0 %v439
    %514 = vmatpush.bf16.msra.mxu0 %v435
    %515 = vmatpush.bf16.msra.mxu0 %v431
    %516 = vmatpush.bf16.msra.mxu0 %v427
    %517 = vmatpush.bf16.msra.mxu0 %v423
    %518 = vmatpush.bf16.msra.mxu0 %v419
    %519 = vmatmul.bf16.gmra.mxu0 %v276
    %v520 = vpop.f32.mrf.mxu0
    %v521 = vadd.f32 %v315, %v520
    %v522 = vpop.f32.mrf.mxu0
    %v523 = vadd.f32 %v315, %v522
    %524 = vmatmul.bf16.gmra.mxu0 %v277
    %v525 = vpop.f32.mrf.mxu0
    %v526 = vadd.f32 %v315, %v525
    %v527 = vpop.f32.mrf.mxu0
    %v528 = vadd.f32 %v315, %v527
    %529 = vmatmul.bf16.gmra.mxu0 %v278
    %v530 = vpop.f32.mrf.mxu0
    %v531 = vadd.f32 %v315, %v530
    %v532 = vpop.f32.mrf.mxu0
    %v533 = vadd.f32 %v315, %v532
    %534 = vmatmul.bf16.gmra.mxu0 %v279
    %v535 = vpop.f32.mrf.mxu0
    %v536 = vadd.f32 %v315, %v535
    %v537 = vpop.f32.mrf.mxu0
    %v538 = vadd.f32 %v315, %v537
    %539 = vdwg.mxu0
    %540 = vmatpush.bf16.msra.mxu0 %v448
    %541 = vmatpush.bf16.msra.mxu0 %v444
    %542 = vmatpush.bf16.msra.mxu0 %v440
    %543 = vmatpush.bf16.msra.mxu0 %v436
    %544 = vmatpush.bf16.msra.mxu0 %v432
    %545 = vmatpush.bf16.msra.mxu0 %v428
    %546 = vmatpush.bf16.msra.mxu0 %v424
    %547 = vmatpush.bf16.msra.mxu0 %v420
    %548 = vmatmul.bf16.gmra.mxu0 %v276
    %v549 = vpop.f32.mrf.mxu0
    %v550 = vadd.f32 %v316, %v549
    %v551 = vpop.f32.mrf.mxu0
    %v552 = vadd.f32 %v316, %v551
    %553 = vmatmul.bf16.gmra.mxu0 %v277
    %v554 = vpop.f32.mrf.mxu0
    %v555 = vadd.f32 %v316, %v554
    %v556 = vpop.f32.mrf.mxu0
    %v557 = vadd.f32 %v316, %v556
    %558 = vmatmul.bf16.gmra.mxu0 %v278
    %v559 = vpop.f32.mrf.mxu0
    %v560 = vadd.f32 %v316, %v559
    %v561 = vpop.f32.mrf.mxu0
    %v562 = vadd.f32 %v316, %v561
    %563 = vmatmul.bf16.gmra.mxu0 %v279
    %v564 = vpop.f32.mrf.mxu0
    %v565 = vadd.f32 %v316, %v564
    %v566 = vpop.f32.mrf.mxu0
    %v567 = vadd.f32 %v316, %v566
    %568 = vdwg.mxu0
    %569 = vmatpush.bf16.msra.mxu0 %v449
    %570 = vmatpush.bf16.msra.mxu0 %v445
    %571 = vmatpush.bf16.msra.mxu0 %v441
    %572 = vmatpush.bf16.msra.mxu0 %v437
    %573 = vmatpush.bf16.msra.mxu0 %v433
    %574 = vmatpush.bf16.msra.mxu0 %v429
    %575 = vmatpush.bf16.msra.mxu0 %v425
    %576 = vmatpush.bf16.msra.mxu0 %v421
    %577 = vmatmul.bf16.gmra.mxu0 %v276
    %v578 = vpop.f32.mrf.mxu0
    %v579 = vadd.f32 %v317, %v578
    %v580 = vpop.f32.mrf.mxu0
    %v581 = vadd.f32 %v317, %v580
    %582 = vmatmul.bf16.gmra.mxu0 %v277
    %v583 = vpop.f32.mrf.mxu0
    %v584 = vadd.f32 %v317, %v583
    %v585 = vpop.f32.mrf.mxu0
    %v586 = vadd.f32 %v317, %v585
    %587 = vmatmul.bf16.gmra.mxu0 %v278
    %v588 = vpop.f32.mrf.mxu0
    %v589 = vadd.f32 %v317, %v588
    %v590 = vpop.f32.mrf.mxu0
    %v591 = vadd.f32 %v317, %v590
    %592 = vmatmul.bf16.gmra.mxu0 %v279
    %v593 = vpop.f32.mrf.mxu0
    %v594 = vadd.f32 %v317, %v593
    %v595 = vpop.f32.mrf.mxu0
    %v596 = vadd.f32 %v317, %v595
    %597 = vdwg.mxu0
    %v598 = vmax.f32 %v492, 0.0
    %v599 = vmax.f32 %v521, 0.0
    %v600 = vmax.f32 %v550, 0.0
    %v601 = vmax.f32 %v579, 0.0
    %v602 = vmax.f32 %v494, 0.0
    %v603 = vmax.f32 %v523, 0.0
    %v604 = vmax.f32 %v552, 0.0
    %v605 = vmax.f32 %v581, 0.0
    %v606 = vmax.f32 %v497, 0.0
    %v607 = vmax.f32 %v526, 0.0
    %v608 = vmax.f32 %v555, 0.0
    %v609 = vmax.f32 %v584, 0.0
    %v610 = vmax.f32 %v499, 0.0
    %v611 = vmax.f32 %v528, 0.0
    %v612 = vmax.f32 %v557, 0.0
    %v613 = vmax.f32 %v586, 0.0
    %v614 = vmax.f32 %v502, 0.0
    %v615 = vmax.f32 %v531, 0.0
    %v616 = vmax.f32 %v560, 0.0
    %v617 = vmax.f32 %v589, 0.0
    %v618 = vmax.f32 %v504, 0.0
    %v619 = vmax.f32 %v533, 0.0
    %v620 = vmax.f32 %v562, 0.0
    %v621 = vmax.f32 %v591, 0.0
    %v622 = vmax.f32 %v507, 0.0
    %v623 = vmax.f32 %v536, 0.0
    %v624 = vmax.f32 %v565, 0.0
    %v625 = vmax.f32 %v594, 0.0
    %v626 = vmax.f32 %v509, 0.0
    %v627 = vmax.f32 %v538, 0.0
    %v628 = vmax.f32 %v567, 0.0
    %v629 = vmax.f32 %v596, 0.0
    %v630 = vpack.c.bf16 %v602, %v598
    %v631 = vpack.c.bf16 %v603, %v599
    %v632 = vpack.c.bf16 %v604, %v600
    %v633 = vpack.c.bf16 %v605, %v601
    %v634 = vpack.c.bf16 %v610, %v606
    %v635 = vpack.c.bf16 %v611, %v607
    %v636 = vpack.c.bf16 %v612, %v608
    %v637 = vpack.c.bf16 %v613, %v609
    %v638 = vpack.c.bf16 %v618, %v614
    %v639 = vpack.c.bf16 %v619, %v615
    %v640 = vpack.c.bf16 %v620, %v616
    %v641 = vpack.c.bf16 %v621, %v617
    %v642 = vpack.c.bf16 %v626, %v622
    %v643 = vpack.c.bf16 %v627, %v623
    %v644 = vpack.c.bf16 %v628, %v624
    %v645 = vpack.c.bf16 %v629, %v625
    %v646 = vld [vmem:[#allocation9] sm:$0xf]
    %v647 = vld [vmem:[#allocation9 + $0x4] sm:$0xf]
    %v648 = vld [vmem:[#allocation9 + $0x8] sm:$0xf]
    %v649 = vld [vmem:[#allocation9 + $0xc] sm:$0xf]
    %v650 = vld [vmem:[#allocation9 + $0x10] sm:$0xf]
    %v651 = vld [vmem:[#allocation9 + $0x14] sm:$0xf]
    %v652 = vld [vmem:[#allocation9 + $0x18] sm:$0xf]
    %v653 = vld [vmem:[#allocation9 + $0x1c] sm:$0xf]
    %v654 = vld [vmem:[#allocation9 + $0x20] sm:$0xf]
    %v655 = vld [vmem:[#allocation9 + $0x24] sm:$0xf]
    %v656 = vld [vmem:[#allocation9 + $0x28] sm:$0xf]
    %v657 = vld [vmem:[#allocation9 + $0x2c] sm:$0xf]
    %v658 = vld [vmem:[#allocation9 + $0x30] sm:$0xf]
    %v659 = vld [vmem:[#allocation9 + $0x34] sm:$0xf]
    %v660 = vld [vmem:[#allocation9 + $0x38] sm:$0xf]
    %v661 = vld [vmem:[#allocation9 + $0x3c] sm:$0xf]
    %v662 = vld [vmem:[#allocation9 + $0x40] sm:$0xf]
    %v663 = vld [vmem:[#allocation9 + $0x44] sm:$0xf]
    %v664 = vld [vmem:[#allocation9 + $0x48] sm:$0xf]
    %v665 = vld [vmem:[#allocation9 + $0x4c] sm:$0xf]
    %v666 = vld [vmem:[#allocation9 + $0x50] sm:$0xf]
    %v667 = vld [vmem:[#allocation9 + $0x54] sm:$0xf]
    %v668 = vld [vmem:[#allocation9 + $0x58] sm:$0xf]
    %v669 = vld [vmem:[#allocation9 + $0x5c] sm:$0xf]
    %v670 = vld [vmem:[#allocation9 + $0x60] sm:$0xf]
    %v671 = vld [vmem:[#allocation9 + $0x64] sm:$0xf]
    %v672 = vld [vmem:[#allocation9 + $0x68] sm:$0xf]
    %v673 = vld [vmem:[#allocation9 + $0x6c] sm:$0xf]
    %v674 = vld [vmem:[#allocation9 + $0x70] sm:$0xf]
    %v675 = vld [vmem:[#allocation9 + $0x74] sm:$0xf]
    %v676 = vld [vmem:[#allocation9 + $0x78] sm:$0xf]
    %v677 = vld [vmem:[#allocation9 + $0x7c] sm:$0xf]
    %v678 = vld [vmem:[#allocation9 + $0x80] sm:$0xf]
    %v679 = vld [vmem:[#allocation9 + $0x84] sm:$0xf]
    %v680 = vld [vmem:[#allocation9 + $0x88] sm:$0xf]
    %v681 = vld [vmem:[#allocation9 + $0x8c] sm:$0xf]
    %v682 = vld [vmem:[#allocation9 + $0x90] sm:$0xf]
    %v683 = vld [vmem:[#allocation9 + $0x94] sm:$0xf]
    %v684 = vld [vmem:[#allocation9 + $0x98] sm:$0xf]
    %v685 = vld [vmem:[#allocation9 + $0x9c] sm:$0xf]
    %v686 = vld [vmem:[#allocation9 + $0xa0] sm:$0xf]
    %v687 = vld [vmem:[#allocation9 + $0xa4] sm:$0xf]
    %v688 = vld [vmem:[#allocation9 + $0xa8] sm:$0xf]
    %v689 = vld [vmem:[#allocation9 + $0xac] sm:$0xf]
    %v690 = vld [vmem:[#allocation9 + $0xb0] sm:$0xf]
    %v691 = vld [vmem:[#allocation9 + $0xb4] sm:$0xf]
    %v692 = vld [vmem:[#allocation9 + $0xb8] sm:$0xf]
    %v693 = vld [vmem:[#allocation9 + $0xbc] sm:$0xf]
    %v694 = vld [vmem:[#allocation9 + $0xc0] sm:$0xf]
    %v695 = vld [vmem:[#allocation9 + $0xc4] sm:$0xf]
    %v696 = vld [vmem:[#allocation9 + $0xc8] sm:$0xf]
    %v697 = vld [vmem:[#allocation9 + $0xcc] sm:$0xf]
    %v698 = vld [vmem:[#allocation9 + $0xd0] sm:$0xf]
    %v699 = vld [vmem:[#allocation9 + $0xd4] sm:$0xf]
    %v700 = vld [vmem:[#allocation9 + $0xd8] sm:$0xf]
    %v701 = vld [vmem:[#allocation9 + $0xdc] sm:$0xf]
    %v702 = vld [vmem:[#allocation9 + $0xe0] sm:$0xf]
    %v703 = vld [vmem:[#allocation9 + $0xe4] sm:$0xf]
    %v704 = vld [vmem:[#allocation9 + $0xe8] sm:$0xf]
    %v705 = vld [vmem:[#allocation9 + $0xec] sm:$0xf]
    %v706 = vld [vmem:[#allocation9 + $0xf0] sm:$0xf]
    %v707 = vld [vmem:[#allocation9 + $0xf4] sm:$0xf]
    %v708 = vld [vmem:[#allocation9 + $0xf8] sm:$0xf]
    %v709 = vld [vmem:[#allocation9 + $0xfc] sm:$0xf]
    %v710 = vld [vmem:[#allocation14 + $0x5] sm:$0x1]
    %v712 = vperm.slane %v710, 0
    %v778 = vunpack.c.l.b16 %v646
    %v779 = vunpack.c.l.b16 %v647
    %v780 = vunpack.c.l.b16 %v648
    %v781 = vunpack.c.l.b16 %v649
    %v782 = vunpack.c.l.b16 %v650
    %v783 = vunpack.c.l.b16 %v651
    %v784 = vunpack.c.l.b16 %v652
    %v785 = vunpack.c.l.b16 %v653
    %v786 = vunpack.c.l.b16 %v654
    %v787 = vunpack.c.l.b16 %v655
    %v788 = vunpack.c.l.b16 %v656
    %v789 = vunpack.c.l.b16 %v657
    %v790 = vunpack.c.l.b16 %v658
    %v791 = vunpack.c.l.b16 %v659
    %v792 = vunpack.c.l.b16 %v660
    %v793 = vunpack.c.l.b16 %v661
    %v794 = vunpack.c.l.b16 %v662
    %v795 = vunpack.c.l.b16 %v663
    %v796 = vunpack.c.l.b16 %v664
    %v797 = vunpack.c.l.b16 %v665
    %v798 = vunpack.c.l.b16 %v666
    %v799 = vunpack.c.l.b16 %v667
    %v800 = vunpack.c.l.b16 %v668
    %v801 = vunpack.c.l.b16 %v669
    %v802 = vunpack.c.l.b16 %v670
    %v803 = vunpack.c.l.b16 %v671
    %v804 = vunpack.c.l.b16 %v672
    %v805 = vunpack.c.l.b16 %v673
    %v806 = vunpack.c.l.b16 %v674
    %v807 = vunpack.c.l.b16 %v675
    %v808 = vunpack.c.l.b16 %v676
    %v809 = vunpack.c.l.b16 %v677
    %v810 = vunpack.c.l.b16 %v678
    %v811 = vunpack.c.l.b16 %v679
    %v812 = vunpack.c.l.b16 %v680
    %v813 = vunpack.c.l.b16 %v681
    %v814 = vunpack.c.l.b16 %v682
    %v815 = vunpack.c.l.b16 %v683
    %v816 = vunpack.c.l.b16 %v684
    %v817 = vunpack.c.l.b16 %v685
    %v818 = vunpack.c.l.b16 %v686
    %v819 = vunpack.c.l.b16 %v687
    %v820 = vunpack.c.l.b16 %v688
    %v821 = vunpack.c.l.b16 %v689
    %v822 = vunpack.c.l.b16 %v690
    %v823 = vunpack.c.l.b16 %v691
    %v824 = vunpack.c.l.b16 %v692
    %v825 = vunpack.c.l.b16 %v693
    %v826 = vunpack.c.l.b16 %v694
    %v827 = vunpack.c.l.b16 %v695
    %v828 = vunpack.c.l.b16 %v696
    %v829 = vunpack.c.l.b16 %v697
    %v830 = vunpack.c.l.b16 %v698
    %v831 = vunpack.c.l.b16 %v699
    %v832 = vunpack.c.l.b16 %v700
    %v833 = vunpack.c.l.b16 %v701
    %v834 = vunpack.c.l.b16 %v702
    %v835 = vunpack.c.l.b16 %v703
    %v836 = vunpack.c.l.b16 %v704
    %v837 = vunpack.c.l.b16 %v705
    %v838 = vunpack.c.l.b16 %v706
    %v839 = vunpack.c.l.b16 %v707
    %v840 = vunpack.c.l.b16 %v708
    %v841 = vunpack.c.l.b16 %v709
    %v842 = vpack.c.b16 %v779, %v778
    %v843 = vpack.c.b16 %v781, %v780
    %v844 = vpack.c.b16 %v783, %v782
    %v845 = vpack.c.b16 %v785, %v784
    %v846 = vpack.c.b16 %v787, %v786
    %v847 = vpack.c.b16 %v789, %v788
    %v848 = vpack.c.b16 %v791, %v790
    %v849 = vpack.c.b16 %v793, %v792
    %v850 = vpack.c.b16 %v795, %v794
    %v851 = vpack.c.b16 %v797, %v796
    %v852 = vpack.c.b16 %v799, %v798
    %v853 = vpack.c.b16 %v801, %v800
    %v854 = vpack.c.b16 %v803, %v802
    %v855 = vpack.c.b16 %v805, %v804
    %v856 = vpack.c.b16 %v807, %v806
    %v857 = vpack.c.b16 %v809, %v808
    %v858 = vpack.c.b16 %v811, %v810
    %v859 = vpack.c.b16 %v813, %v812
    %v860 = vpack.c.b16 %v815, %v814
    %v861 = vpack.c.b16 %v817, %v816
    %v862 = vpack.c.b16 %v819, %v818
    %v863 = vpack.c.b16 %v821, %v820
    %v864 = vpack.c.b16 %v823, %v822
    %v865 = vpack.c.b16 %v825, %v824
    %v866 = vpack.c.b16 %v827, %v826
    %v867 = vpack.c.b16 %v829, %v828
    %v868 = vpack.c.b16 %v831, %v830
    %v869 = vpack.c.b16 %v833, %v832
    %v870 = vpack.c.b16 %v835, %v834
    %v871 = vpack.c.b16 %v837, %v836
    %v872 = vpack.c.b16 %v839, %v838
    %v873 = vpack.c.b16 %v841, %v840
    %906 = vmatpush.bf16.msra.mxu0 %v849
    %907 = vmatpush.bf16.msra.mxu0 %v848
    %908 = vmatpush.bf16.msra.mxu0 %v847
    %909 = vmatpush.bf16.msra.mxu0 %v846
    %910 = vmatpush.bf16.msra.mxu0 %v845
    %911 = vmatpush.bf16.msra.mxu0 %v844
    %912 = vmatpush.bf16.msra.mxu0 %v843
    %913 = vmatpush.bf16.msra.mxu0 %v842
    %914 = vmatmul.bf16.gmra.mxu0 %v630
    %v915 = vpop.f32.mrf.mxu0
    %v916 = vadd.f32 %v712, %v915
    %v917 = vpop.f32.mrf.mxu0
    %v918 = vadd.f32 %v712, %v917
    %919 = vmatmul.bf16.gmra.mxu0 %v634
    %v920 = vpop.f32.mrf.mxu0
    %v921 = vadd.f32 %v712, %v920
    %v922 = vpop.f32.mrf.mxu0
    %v923 = vadd.f32 %v712, %v922
    %924 = vmatmul.bf16.gmra.mxu0 %v638
    %v925 = vpop.f32.mrf.mxu0
    %v926 = vadd.f32 %v712, %v925
    %v927 = vpop.f32.mrf.mxu0
    %v928 = vadd.f32 %v712, %v927
    %929 = vmatmul.bf16.gmra.mxu0 %v642
    %v930 = vpop.f32.mrf.mxu0
    %v931 = vadd.f32 %v712, %v930
    %v932 = vpop.f32.mrf.mxu0
    %v933 = vadd.f32 %v712, %v932
    %934 = vdwg.mxu0
    %935 = vmatpush.bf16.msra.mxu0 %v857
    %936 = vmatpush.bf16.msra.mxu0 %v856
    %937 = vmatpush.bf16.msra.mxu0 %v855
    %938 = vmatpush.bf16.msra.mxu0 %v854
    %939 = vmatpush.bf16.msra.mxu0 %v853
    %940 = vmatpush.bf16.msra.mxu0 %v852
    %941 = vmatpush.bf16.msra.mxu0 %v851
    %942 = vmatpush.bf16.msra.mxu0 %v850
    %943 = vmatmul.bf16.gmra.mxu0 %v631
    %v944 = vpop.f32.mrf.mxu0
    %v945 = vadd.f32 %v916, %v944
    %v946 = vpop.f32.mrf.mxu0
    %v947 = vadd.f32 %v918, %v946
    %948 = vmatmul.bf16.gmra.mxu0 %v635
    %v949 = vpop.f32.mrf.mxu0
    %v950 = vadd.f32 %v921, %v949
    %v951 = vpop.f32.mrf.mxu0
    %v952 = vadd.f32 %v923, %v951
    %953 = vmatmul.bf16.gmra.mxu0 %v639
    %v954 = vpop.f32.mrf.mxu0
    %v955 = vadd.f32 %v926, %v954
    %v956 = vpop.f32.mrf.mxu0
    %v957 = vadd.f32 %v928, %v956
    %958 = vmatmul.bf16.gmra.mxu0 %v643
    %v959 = vpop.f32.mrf.mxu0
    %v960 = vadd.f32 %v931, %v959
    %v961 = vpop.f32.mrf.mxu0
    %v962 = vadd.f32 %v933, %v961
    %963 = vdwg.mxu0
    %964 = vmatpush.bf16.msra.mxu0 %v865
    %965 = vmatpush.bf16.msra.mxu0 %v864
    %966 = vmatpush.bf16.msra.mxu0 %v863
    %967 = vmatpush.bf16.msra.mxu0 %v862
    %968 = vmatpush.bf16.msra.mxu0 %v861
    %969 = vmatpush.bf16.msra.mxu0 %v860
    %970 = vmatpush.bf16.msra.mxu0 %v859
    %971 = vmatpush.bf16.msra.mxu0 %v858
    %972 = vmatmul.bf16.gmra.mxu0 %v632
    %v973 = vpop.f32.mrf.mxu0
    %v974 = vadd.f32 %v945, %v973
    %v975 = vpop.f32.mrf.mxu0
    %v976 = vadd.f32 %v947, %v975
    %977 = vmatmul.bf16.gmra.mxu0 %v636
    %v978 = vpop.f32.mrf.mxu0
    %v979 = vadd.f32 %v950, %v978
    %v980 = vpop.f32.mrf.mxu0
    %v981 = vadd.f32 %v952, %v980
    %982 = vmatmul.bf16.gmra.mxu0 %v640
    %v983 = vpop.f32.mrf.mxu0
    %v984 = vadd.f32 %v955, %v983
    %v985 = vpop.f32.mrf.mxu0
    %v986 = vadd.f32 %v957, %v985
    %987 = vmatmul.bf16.gmra.mxu0 %v644
    %v988 = vpop.f32.mrf.mxu0
    %v989 = vadd.f32 %v960, %v988
    %v990 = vpop.f32.mrf.mxu0
    %v991 = vadd.f32 %v962, %v990
    %992 = vdwg.mxu0
    %993 = vmatpush.bf16.msra.mxu0 %v873
    %994 = vmatpush.bf16.msra.mxu0 %v872
    %995 = vmatpush.bf16.msra.mxu0 %v871
    %996 = vmatpush.bf16.msra.mxu0 %v870
    %997 = vmatpush.bf16.msra.mxu0 %v869
    %998 = vmatpush.bf16.msra.mxu0 %v868
    %999 = vmatpush.bf16.msra.mxu0 %v867
    %1000 = vmatpush.bf16.msra.mxu0 %v866
    %1001 = vmatmul.bf16.gmra.mxu0 %v633
    %v1002 = vpop.f32.mrf.mxu0
    %v1003 = vadd.f32 %v974, %v1002
    %v1004 = vpop.f32.mrf.mxu0
    %v1005 = vadd.f32 %v976, %v1004
    %1006 = vmatmul.bf16.gmra.mxu0 %v637
    %v1007 = vpop.f32.mrf.mxu0
    %v1008 = vadd.f32 %v979, %v1007
    %v1009 = vpop.f32.mrf.mxu0
    %v1010 = vadd.f32 %v981, %v1009
    %1011 = vmatmul.bf16.gmra.mxu0 %v641
    %v1012 = vpop.f32.mrf.mxu0
    %v1013 = vadd.f32 %v984, %v1012
    %v1014 = vpop.f32.mrf.mxu0
    %v1015 = vadd.f32 %v986, %v1014
    %1016 = vmatmul.bf16.gmra.mxu0 %v645
    %v1017 = vpop.f32.mrf.mxu0
    %v1018 = vadd.f32 %v989, %v1017
    %v1019 = vpop.f32.mrf.mxu0
    %v1020 = vadd.f32 %v991, %v1019
    %1021 = vdwg.mxu0
    %v1022 = vmax.f32 %v1003, 0.0
    %v1023 = vmax.f32 %v1005, 0.0
    %v1024 = vmax.f32 %v1008, 0.0
    %v1025 = vmax.f32 %v1010, 0.0
    %v1026 = vmax.f32 %v1013, 0.0
    %v1027 = vmax.f32 %v1015, 0.0
    %v1028 = vmax.f32 %v1018, 0.0
    %v1029 = vmax.f32 %v1020, 0.0
    %v1030 = vpack.c.bf16 %v1023, %v1022
    %v1031 = vpack.c.bf16 %v1025, %v1024
    %v1032 = vpack.c.bf16 %v1027, %v1026
    %v1033 = vpack.c.bf16 %v1029, %v1028
    %v1034 = vld [vmem:[#allocation11] sm:$0xf]
    %v1035 = vld [vmem:[#allocation11 + $0x4] sm:$0xf]
    %v1036 = vld [vmem:[#allocation11 + $0x8] sm:$0xf]
    %v1037 = vld [vmem:[#allocation11 + $0xc] sm:$0xf]
    %v1038 = vld [vmem:[#allocation11 + $0x10] sm:$0xf]
    %v1039 = vld [vmem:[#allocation11 + $0x14] sm:$0xf]
    %v1040 = vld [vmem:[#allocation11 + $0x18] sm:$0xf]
    %v1041 = vld [vmem:[#allocation11 + $0x1c] sm:$0xf]
    %v1042 = vld [vmem:[#allocation11 + $0x20] sm:$0xf]
    %v1043 = vld [vmem:[#allocation11 + $0x24] sm:$0xf]
    %v1044 = vld [vmem:[#allocation11 + $0x28] sm:$0xf]
    %v1045 = vld [vmem:[#allocation11 + $0x2c] sm:$0xf]
    %v1046 = vld [vmem:[#allocation11 + $0x30] sm:$0xf]
    %v1047 = vld [vmem:[#allocation11 + $0x34] sm:$0xf]
    %v1048 = vld [vmem:[#allocation11 + $0x38] sm:$0xf]
    %v1049 = vld [vmem:[#allocation11 + $0x3c] sm:$0xf]
    %v1050 = vld [vmem:[#allocation14 + $0x6] sm:$0x1]
    %v1052 = vperm.slane %v1050, 0
    %v1070 = vunpack.c.l.b16 %v1034
    %v1071 = vunpack.c.l.b16 %v1035
    %v1072 = vunpack.c.l.b16 %v1036
    %v1073 = vunpack.c.l.b16 %v1037
    %v1074 = vunpack.c.l.b16 %v1038
    %v1075 = vunpack.c.l.b16 %v1039
    %v1076 = vunpack.c.l.b16 %v1040
    %v1077 = vunpack.c.l.b16 %v1041
    %v1078 = vunpack.c.l.b16 %v1042
    %v1079 = vunpack.c.l.b16 %v1043
    %v1080 = vunpack.c.l.b16 %v1044
    %v1081 = vunpack.c.l.b16 %v1045
    %v1082 = vunpack.c.l.b16 %v1046
    %v1083 = vunpack.c.l.b16 %v1047
    %v1084 = vunpack.c.l.b16 %v1048
    %v1085 = vunpack.c.l.b16 %v1049
    %v1086 = vpack.c.b16 %v1071, %v1070
    %v1087 = vpack.c.b16 %v1073, %v1072
    %v1088 = vpack.c.b16 %v1075, %v1074
    %v1089 = vpack.c.b16 %v1077, %v1076
    %v1090 = vpack.c.b16 %v1079, %v1078
    %v1091 = vpack.c.b16 %v1081, %v1080
    %v1092 = vpack.c.b16 %v1083, %v1082
    %v1093 = vpack.c.b16 %v1085, %v1084
    %1102 = vmatpush.bf16.msra.mxu0 %v1093
    %1103 = vmatpush.bf16.msra.mxu0 %v1092
    %1104 = vmatpush.bf16.msra.mxu0 %v1091
    %1105 = vmatpush.bf16.msra.mxu0 %v1090
    %1106 = vmatpush.bf16.msra.mxu0 %v1089
    %1107 = vmatpush.bf16.msra.mxu0 %v1088
    %1108 = vmatpush.bf16.msra.mxu0 %v1087
    %1109 = vmatpush.bf16.msra.mxu0 %v1086
    %1110 = vmatmul.bf16.gmra.mxu0 %v1030
    %v1111 = vpop.f32.mrf.mxu0
    %v1112 = vadd.f32 %v1052, %v1111
    %v1113 = vpop.f32.mrf.mxu0
    %v1114 = vadd.f32 %v1052, %v1113
    %1115 = vmatmul.bf16.gmra.mxu0 %v1031
    %v1116 = vpop.f32.mrf.mxu0
    %v1117 = vadd.f32 %v1052, %v1116
    %v1118 = vpop.f32.mrf.mxu0
    %v1119 = vadd.f32 %v1052, %v1118
    %1120 = vmatmul.bf16.gmra.mxu0 %v1032
    %v1121 = vpop.f32.mrf.mxu0
    %v1122 = vadd.f32 %v1052, %v1121
    %v1123 = vpop.f32.mrf.mxu0
    %v1124 = vadd.f32 %v1052, %v1123
    %1125 = vmatmul.bf16.gmra.mxu0 %v1033
    %v1126 = vpop.f32.mrf.mxu0
    %v1127 = vadd.f32 %v1052, %v1126
    %v1128 = vpop.f32.mrf.mxu0
    %v1129 = vadd.f32 %v1052, %v1128
    %1130 = vdwg.mxu0
    %v1131 = vmax.f32 %v1112, 0.0
    %v1132 = vmax.f32 %v1114, 0.0
    %v1133 = vmax.f32 %v1117, 0.0
    %v1134 = vmax.f32 %v1119, 0.0
    %v1135 = vmax.f32 %v1122, 0.0
    %v1136 = vmax.f32 %v1124, 0.0
    %v1137 = vmax.f32 %v1127, 0.0
    %v1138 = vmax.f32 %v1129, 0.0
    %v1139 = vpack.c.bf16 %v1132, %v1131
    %v1140 = vpack.c.bf16 %v1134, %v1133
    %v1141 = vpack.c.bf16 %v1136, %v1135
    %v1142 = vpack.c.bf16 %v1138, %v1137
    %v1143 = vld [vmem:[#allocation12] sm:$0xf]
    %v1144 = vld [vmem:[#allocation12 + $0x4] sm:$0xf]
    %v1145 = vld [vmem:[#allocation12 + $0x8] sm:$0xf]
    %v1146 = vld [vmem:[#allocation12 + $0xc] sm:$0xf]
    %v1147 = vld [vmem:[#allocation12 + $0x10] sm:$0xf]
    %v1148 = vld [vmem:[#allocation12 + $0x14] sm:$0xf]
    %v1149 = vld [vmem:[#allocation12 + $0x18] sm:$0xf]
    %v1150 = vld [vmem:[#allocation12 + $0x1c] sm:$0xf]
    %v1151 = vld [vmem:[#allocation12 + $0x20] sm:$0xf]
    %v1152 = vld [vmem:[#allocation12 + $0x24] sm:$0xf]
    %v1153 = vld [vmem:[#allocation12 + $0x28] sm:$0xf]
    %v1154 = vld [vmem:[#allocation12 + $0x2c] sm:$0xf]
    %v1155 = vld [vmem:[#allocation12 + $0x30] sm:$0xf]
    %v1156 = vld [vmem:[#allocation12 + $0x34] sm:$0xf]
    %v1157 = vld [vmem:[#allocation12 + $0x38] sm:$0xf]
    %v1158 = vld [vmem:[#allocation12 + $0x3c] sm:$0xf]
    %v1159 = vld [vmem:[#allocation14 + $0x7] sm:$0x1]
    %v1161 = vperm.slane %v1159, 0
    %v1179 = vunpack.c.l.b16 %v1143
    %v1180 = vunpack.c.l.b16 %v1144
    %v1181 = vunpack.c.l.b16 %v1145
    %v1182 = vunpack.c.l.b16 %v1146
    %v1183 = vunpack.c.l.b16 %v1147
    %v1184 = vunpack.c.l.b16 %v1148
    %v1185 = vunpack.c.l.b16 %v1149
    %v1186 = vunpack.c.l.b16 %v1150
    %v1187 = vunpack.c.l.b16 %v1151
    %v1188 = vunpack.c.l.b16 %v1152
    %v1189 = vunpack.c.l.b16 %v1153
    %v1190 = vunpack.c.l.b16 %v1154
    %v1191 = vunpack.c.l.b16 %v1155
    %v1192 = vunpack.c.l.b16 %v1156
    %v1193 = vunpack.c.l.b16 %v1157
    %v1194 = vunpack.c.l.b16 %v1158
    %v1195 = vpack.c.b16 %v1180, %v1179
    %v1196 = vpack.c.b16 %v1182, %v1181
    %v1197 = vpack.c.b16 %v1184, %v1183
    %v1198 = vpack.c.b16 %v1186, %v1185
    %v1199 = vpack.c.b16 %v1188, %v1187
    %v1200 = vpack.c.b16 %v1190, %v1189
    %v1201 = vpack.c.b16 %v1192, %v1191
    %v1202 = vpack.c.b16 %v1194, %v1193
    %1211 = vmatpush.bf16.msra.mxu0 %v1202
    %1212 = vmatpush.bf16.msra.mxu0 %v1201
    %1213 = vmatpush.bf16.msra.mxu0 %v1200
    %1214 = vmatpush.bf16.msra.mxu0 %v1199
    %1215 = vmatpush.bf16.msra.mxu0 %v1198
    %1216 = vmatpush.bf16.msra.mxu0 %v1197
    %1217 = vmatpush.bf16.msra.mxu0 %v1196
    %1218 = vmatpush.bf16.msra.mxu0 %v1195
    %1219 = vmatmul.bf16.gmra.mxu0 %v1139
    %v1220 = vpop.f32.mrf.mxu0
    %v1221 = vadd.f32 %v1161, %v1220
    %v1222 = vpop.f32.mrf.mxu0
    %v1223 = vadd.f32 %v1161, %v1222
    %1224 = vmatmul.bf16.gmra.mxu0 %v1140
    %v1225 = vpop.f32.mrf.mxu0
    %v1226 = vadd.f32 %v1161, %v1225
    %v1227 = vpop.f32.mrf.mxu0
    %v1228 = vadd.f32 %v1161, %v1227
    %1229 = vmatmul.bf16.gmra.mxu0 %v1141
    %v1230 = vpop.f32.mrf.mxu0
    %v1231 = vadd.f32 %v1161, %v1230
    %v1232 = vpop.f32.mrf.mxu0
    %v1233 = vadd.f32 %v1161, %v1232
    %1234 = vmatmul.bf16.gmra.mxu0 %v1142
    %v1235 = vpop.f32.mrf.mxu0
    %v1236 = vadd.f32 %v1161, %v1235
    %v1237 = vpop.f32.mrf.mxu0
    %v1238 = vadd.f32 %v1161, %v1237
    %1239 = vdwg.mxu0
    %v1240 = vtanh.pop %v1221
    %v1241 = vtanh.pop %v1223
    %v1242 = vtanh.pop %v1226
    %v1243 = vtanh.pop %v1228
    %v1244 = vtanh.pop %v1231
    %v1245 = vtanh.pop %v1233
    %v1246 = vtanh.pop %v1236
    %v1247 = vtanh.pop %v1238
    %v1248 = vstv %s138
    %v1249 = vmul.f32 %v1240, %v1248
    %v1250 = vmul.f32 %v1241, %v1248
    %v1251 = vmul.f32 %v1242, %v1248
    %v1252 = vmul.f32 %v1243, %v1248
    %v1253 = vmul.f32 %v1244, %v1248
    %v1254 = vmul.f32 %v1245, %v1248
    %v1255 = vmul.f32 %v1246, %v1248
    %v1256 = vmul.f32 %v1247, %v1248
    %1257 = vst [vmem:[#allocation15] sm:$0xff] %v1249
    %1258 = vst [vmem:[#allocation15 + $0x8] sm:$0xff] %v1250
    %1259 = vst [vmem:[#allocation15 + $0x10] sm:$0xff] %v1251
    %1260 = vst [vmem:[#allocation15 + $0x18] sm:$0xff] %v1252
    %1261 = vst [vmem:[#allocation15 + $0x20] sm:$0xff] %v1253
    %1262 = vst [vmem:[#allocation15 + $0x28] sm:$0xff] %v1254
    %1263 = vst [vmem:[#allocation15 + $0x30] sm:$0xff] %v1255
    %1264 = vst [vmem:[#allocation15 + $0x38] sm:$0xff] %v1256
    // Predicated region
    $region62: #{tpu_custom_call.1} parent=1 // pred_check
      _
    $region63: #{tpu_custom_call.1} parent=1 // pred_check_branch
      %1266 = sbr.rel (0) target = $region65
    $region64: #{tpu_custom_call.1} parent=1 // pred_region
      %1268 = vsyncadd [#allocation5], 0
      %s1269 = sshll.u32 [#allocation15], 4
      %s1270 = int_to_ptr.vmem [resolvable:$true] %s1269
      %s1271 = sshll.u32 %s8, 4
      %s1272 = int_to_ptr.hbm [resolvable:$true] %s1271
      %1277 = dma.vmem_to_hbm [thread:$0]  %s1270, 1024, %s1272, [#allocation5], 128, 128, 8
    $region65: #{tpu_custom_call.1} parent=1 // pred_fallthru
      _
    // Predicated region
    $region66: #{tpu_custom_call.1} parent=1 // pred_check
      _
    $region67: #{tpu_custom_call.1} parent=1 // pred_check_branch
      %1279 = sbr.rel (0) target = $region69
    $region68: #{tpu_custom_call.1} parent=1 // pred_region
      %1281 = dma.done [#allocation5], 1024
    $region69: #{tpu_custom_call.1} parent=1 // pred_fallthru
      _
    %1282 = vsyncpa [#allocation4], 1
    %1283 = vsyncpa [#allocation7], 1
    %1284 = vsyncpa [#allocation10], 1
    %1285 = vsyncpa [#allocation13], 1
    %1286 = vsyncpa [#allocation5], 1

</llo_original>
